<compile_context>
chip_gen: v7x
topology: tpu7x:2x2x1
jax: 0.10.0
libtpu: 0.0.40
codegen_flags: <defaults>
</compile_context>

<pallas_src>
import math
import functools

import jax
import jax.numpy as jnp
from jax.experimental import pallas as pl
from jax.experimental.pallas import tpu as pltpu


# ----------------------------- Pallas kernel ------------------------------- #

def block_lora_kernel(
    x_ref,        # (B*T, C) activations
    w_cc_ref,     # (4, C, C): [wq, wk, wv, wproj]  (in, out), LoRA/LN/scale folded
    wfc_ref,      # (C, 4C)   LoRA/LN folded
    wmproj_ref,   # (4C, C)   LoRA merged
    b_c_ref,      # (5, C):   [bq, bk, bv, bproj, bmproj]
    bfc_ref,      # (1, 4C)
    o_ref,        # (B*T, C)
    *, batch: int, seq: int, n_head: int,
):
    x = x_ref[...]                                 # (B*T, C)
    BT, C = x.shape
    B, T, H = batch, seq, n_head
    hd = C // H
    eps = 1e-5                                     # nn.LayerNorm default

    def layer_norm(v):
        # gamma/beta already folded into the downstream weights/biases
        mu = jnp.mean(v, axis=-1, keepdims=True)
        var = jnp.mean((v - mu) ** 2, axis=-1, keepdims=True)
        return (v - mu) * jax.lax.rsqrt(var + eps)

    def matmul(a, w):
        return jnp.dot(a, w, preferred_element_type=jnp.float32)

    # ---------------- attention branch ----------------
    h = layer_norm(x)                                            # (B*T, C)
    q = matmul(h, w_cc_ref[0]) + b_c_ref[0:1, :]                 # 1/sqrt(hd) folded in
    k = matmul(h, w_cc_ref[1]) + b_c_ref[1:2, :]
    v = matmul(h, w_cc_ref[2]) + b_c_ref[2:3, :]

    def to_heads(m):
        # (B*T, C) -> (B*H, T, hd); layout change done once per tensor,
        # not per head.
        return jnp.transpose(m.reshape(B, T, H, hd), (0, 2, 1, 3)).reshape(B * H, T, hd)

    qh, kh, vh = to_heads(q), to_heads(k), to_heads(v)           # (B*H, T, hd)

    # Scores for all heads in one batched einsum (scale already in q).
    att = jnp.einsum("btd,bsd->bts", qh, kh,
                     preferred_element_type=jnp.float32)         # (B*H, T, T)

    # Causal mask: built once, broadcast over all batch*head rows.
    row = jax.lax.broadcasted_iota(jnp.int32, (T, T), 0)
    col = jax.lax.broadcasted_iota(jnp.int32, (T, T), 1)
    causal = (row >= col)[None, :, :]
    att = jnp.where(causal, att, jnp.float32(-jnp.inf))

    att = att - jnp.max(att, axis=-1, keepdims=True)
    p = jnp.exp(att)
    # One reciprocal per row (EUP) + a broadcast multiply, instead of a
    # full-tensor divide on the VPU path.
    p = p * pl.reciprocal(jnp.sum(p, axis=-1, keepdims=True), approx=False)

    yh = jnp.einsum("bts,bsd->btd", p, vh,
                    preferred_element_type=jnp.float32)          # (B*H, T, hd)
    y = jnp.transpose(yh.reshape(B, H, T, hd), (0, 2, 1, 3)).reshape(BT, C)

    # Single K=C output projection.
    x1 = x + matmul(y, w_cc_ref[3]) + b_c_ref[3:4, :]

    # ---------------- MLP branch ----------------
    h2 = layer_norm(x1)
    fc = matmul(h2, wfc_ref[...]) + bfc_ref[...]                 # (B*T, 4C)
    # GELU (tanh approximation), matches nn.GELU(approximate='tanh')
    c0 = math.sqrt(2.0 / math.pi)
    g = 0.5 * fc * (1.0 + jnp.tanh(c0 * (fc + 0.044715 * fc * fc * fc)))
    o_ref[...] = x1 + matmul(g, wmproj_ref[...]) + b_c_ref[4:5, :]


# ----------------------------- wrapper ------------------------------------- #

def block_lora_forward(x, params, *, n_head: int, rank: int):
    """params are in PyTorch / loralib layout; all folds happen here (host-side)."""
    B, T, C = x.shape
    hd = C // n_head
    s = 1.0 / float(rank)                      # lora_alpha / r with lora_alpha = 1
    inv_sqrt_hd = 1.0 / math.sqrt(hd)

    def merged(w, a, bm):
        # W: (out, in), A: (r, in), B: (out, r) -> (in, out) effective weight
        return (w + s * (bm @ a)).T

    def fold_ln(w_io, b_lin, g, bvec):
        # Linear applied to LN output:  (xhat*g + b) @ W + b_lin
        #   = xhat @ (g[:,None]*W) + (b @ W + b_lin)
        b_new = b_lin + bvec.reshape(1, -1) @ w_io
        w_new = g.reshape(-1, 1) * w_io
        return w_new, b_new

    # c_attn: merge LoRA, split into q/k/v, fold LN1 affine, fold 1/sqrt(hd) into q.
    attn_w = merged(params["attn_w"], params["attn_a"], params["attn_bm"])   # (C, 3C)
    wq, wk, wv = attn_w[:, 0:C], attn_w[:, C:2 * C], attn_w[:, 2 * C:3 * C]
    ab = params["attn_b"]                                                    # (1, 3C)
    bq, bk, bv = ab[:, 0:C], ab[:, C:2 * C], ab[:, 2 * C:3 * C]

    wq, bq = fold_ln(wq, bq, params["ln1_g"], params["ln1_b"])
    wk, bk = fold_ln(wk, bk, params["ln1_g"], params["ln1_b"])
    wv, bv = fold_ln(wv, bv, params["ln1_g"], params["ln1_b"])
    wq, bq = wq * inv_sqrt_hd, bq * inv_sqrt_hd

    wproj = merged(params["proj_w"], params["proj_a"], params["proj_bm"])    # (C, C)
    wfc = merged(params["fc_w"], params["fc_a"], params["fc_bm"])            # (C, 4C)
    wmproj = merged(params["mproj_w"], params["mproj_a"], params["mproj_bm"])  # (4C, C)
    wfc, bfc = fold_ln(wfc, params["fc_b"], params["ln2_g"], params["ln2_b"])

    # Pack small arguments: 18 inputs -> 6.
    w_cc = jnp.stack([wq, wk, wv, wproj], axis=0)                            # (4, C, C)
    b_c = jnp.concatenate(
        [bq, bk, bv, params["proj_b"], params["mproj_b"]], axis=0)           # (5, C)

    kernel = functools.partial(block_lora_kernel, batch=B, seq=T, n_head=n_head)
    vmem_spec = pl.BlockSpec(memory_space=pltpu.MemorySpace.VMEM)

    # No grid: single invocation, everything whole-array VMEM resident — no
    # pointless double-buffering / pipeline prologue for a one-step kernel.
    out2 = pl.pallas_call(
        kernel,
        out_shape=jax.ShapeDtypeStruct((B * T, C), x.dtype),
        in_specs=[vmem_spec] * 6,
        out_specs=vmem_spec,
    )(x.reshape(B * T, C), w_cc, wfc, wmproj, b_c, bfc)
    return out2.reshape(B, T, C)


# ----------------------------- pure-JAX reference --------------------------- #
# Exact un-merged PyTorch/loralib semantics (base matmul + rank-r LoRA path).

def _ln_ref(x, g, b, eps=1e-5):
    mu = x.mean(-1, keepdims=True)
    var = ((x - mu) ** 2).mean(-1, keepdims=True)
    return (x - mu) / jnp.sqrt(var + eps) * g + b


def _lora_lin_ref(x, w, b, a, bm, scaling):
    return x @ w.T + b + (x @ a.T @ bm.T) * scaling


def block_lora_reference(x, p, *, n_head, rank):
    B, T, C = x.shape
    hd = C // n_head
    s = 1.0 / rank

    h = _ln_ref(x, p["ln1_g"], p["ln1_b"])
    qkv = _lora_lin_ref(h, p["attn_w"], p["attn_b"], p["attn_a"], p["attn_bm"], s)
    q, k, v = jnp.split(qkv, 3, axis=-1)
    q = q.reshape(B, T, n_head, hd).transpose(0, 2, 1, 3)
    k = k.reshape(B, T, n_head, hd).transpose(0, 2, 1, 3)
    v = v.reshape(B, T, n_head, hd).transpose(0, 2, 1, 3)
    att = jnp.einsum("bhtd,bhsd->bhts", q, k) / math.sqrt(hd)
    mask = jnp.tril(jnp.ones((T, T), bool))
    att = jnp.where(mask[None, None], att, -jnp.inf)
    att = jax.nn.softmax(att, axis=-1)
    y = jnp.einsum("bhts,bhsd->bhtd", att, v).transpose(0, 2, 1, 3).reshape(B, T, C)
    x = x + _lora_lin_ref(y, p["proj_w"], p["proj_b"], p["proj_a"], p["proj_bm"], s)

    h2 = _ln_ref(x, p["ln2_g"], p["ln2_b"])
    fc = _lora_lin_ref(h2, p["fc_w"], p["fc_b"], p["fc_a"], p["fc_bm"], s)
    g = jax.nn.gelu(fc, approximate=True)
    x = x + _lora_lin_ref(g, p["mproj_w"], p["mproj_b"], p["mproj_a"], p["mproj_bm"], s)
    return x


# ----------------------------- main ----------------------------------------- #

if __name__ == "__main__":
    # Config (small, consistent with the module): n_embd=32, n_head=4,
    # block_size=8 (== T), rank=4.
    B, T, C = 2, 8, 32
    n_head, rank = 4, 4

    key = jax.random.PRNGKey(0)
    keys = jax.random.split(key, 24)
    std = 0.02

    def nrm(k, shape, scale=std):
        return (scale * jax.random.normal(k, shape)).astype(jnp.float32)

    params = {
        # LayerNorms (gamma near 1, beta small) — stored as (1, C) for TPU layout
        "ln1_g": 1.0 + nrm(keys[0], (1, C), 0.1),
        "ln1_b": nrm(keys[1], (1, C), 0.1),
        "ln2_g": 1.0 + nrm(keys[2], (1, C), 0.1),
        "ln2_b": nrm(keys[3], (1, C), 0.1),
        # attn.c_attn : Linear(C, 3C, r)
        "attn_w": nrm(keys[4], (3 * C, C)),
        "attn_b": nrm(keys[5], (1, 3 * C)),
        "attn_a": nrm(keys[6], (rank, C), 0.1),
        "attn_bm": nrm(keys[7], (3 * C, rank), 0.1),
        # attn.c_proj : Linear(C, C, r)
        "proj_w": nrm(keys[8], (C, C)),
        "proj_b": nrm(keys[9], (1, C)),
        "proj_a": nrm(keys[10], (rank, C), 0.1),
        "proj_bm": nrm(keys[11], (C, rank), 0.1),
        # mlp.c_fc : Linear(C, 4C, r)
        "fc_w": nrm(keys[12], (4 * C, C)),
        "fc_b": nrm(keys[13], (1, 4 * C)),
        "fc_a": nrm(keys[14], (rank, C), 0.1),
        "fc_bm": nrm(keys[15], (4 * C, rank), 0.1),
        # mlp.c_proj : Linear(4C, C, r)
        "mproj_w": nrm(keys[16], (C, 4 * C)),
        "mproj_b": nrm(keys[17], (1, C)),
        "mproj_a": nrm(keys[18], (rank, 4 * C), 0.1),
        "mproj_bm": nrm(keys[19], (C, rank), 0.1),
    }

    x = jax.random.normal(keys[20], (B, T, C), dtype=jnp.float32)

    out = block_lora_forward(x, params, n_head=n_head, rank=rank)
    out = jax.block_until_ready(out)

    ref = block_lora_reference(x, params, n_head=n_head, rank=rank)
    assert out.shape == (B, T, C)
    assert jnp.allclose(out, ref, atol=1e-3, rtol=1e-3), (
        f"max abs err = {jnp.max(jnp.abs(out - ref))}"
    )

    print("KERNEL_OK")
</pallas_src>

<mosaic_0001>
module attributes {stable_mosaic.version = 11 : i64} {
  func.func @block_lora_kernel(%arg0: memref<16x32xf32, #tpu.memory_space<vmem>>, %arg1: memref<4x32x32xf32, #tpu.memory_space<vmem>>, %arg2: memref<32x128xf32, #tpu.memory_space<vmem>>, %arg3: memref<128x32xf32, #tpu.memory_space<vmem>>, %arg4: memref<5x32xf32, #tpu.memory_space<vmem>>, %arg5: memref<1x128xf32, #tpu.memory_space<vmem>>, %arg6: memref<16x32xf32, #tpu.memory_space<vmem>>) attributes {dimension_semantics = [], scalar_prefetch = 0 : i64, scratch_operands = 0 : i64, tpu.core_type = #tpu.core_type<tc>} {
    %c0 = arith.constant 0 : index
    %c0_0 = arith.constant 0 : index
    %0 = vector.load %arg0[%c0, %c0_0] : memref<16x32xf32, #tpu.memory_space<vmem>>, vector<16x32xf32>
    %cst = arith.constant dense<0.000000e+00> : vector<16xf32>
    %1 = vector.multi_reduction <add>, %0, %cst [1] : vector<16x32xf32> to vector<16xf32>
    %2 = vector.shape_cast %1 : vector<16xf32> to vector<16x1xf32>
    %cst_1 = arith.constant 3.200000e+01 : f32
    %3 = vector.broadcast %cst_1 : f32 to vector<16x1xf32>
    %4 = arith.divf %2, %3 : vector<16x1xf32>
    %5 = vector.broadcast %4 : vector<16x1xf32> to vector<16x32xf32>
    %6 = arith.subf %0, %5 : vector<16x32xf32>
    %7 = arith.mulf %6, %6 : vector<16x32xf32>
    %cst_2 = arith.constant dense<0.000000e+00> : vector<16xf32>
    %8 = vector.multi_reduction <add>, %7, %cst_2 [1] : vector<16x32xf32> to vector<16xf32>
    %9 = vector.shape_cast %8 : vector<16xf32> to vector<16x1xf32>
    %cst_3 = arith.constant 3.200000e+01 : f32
    %10 = vector.broadcast %cst_3 : f32 to vector<16x1xf32>
    %11 = arith.divf %9, %10 : vector<16x1xf32>
    %12 = vector.broadcast %4 : vector<16x1xf32> to vector<16x32xf32>
    %13 = arith.subf %0, %12 : vector<16x32xf32>
    %cst_4 = arith.constant 9.99999974E-6 : f32
    %14 = vector.broadcast %cst_4 : f32 to vector<16x1xf32>
    %15 = arith.addf %11, %14 : vector<16x1xf32>
    %16 = math.rsqrt %15 : vector<16x1xf32>
    %17 = vector.broadcast %16 : vector<16x1xf32> to vector<16x32xf32>
    %18 = arith.mulf %13, %17 : vector<16x32xf32>
    %c0_5 = arith.constant 0 : index
    %c0_6 = arith.constant 0 : index
    %c0_7 = arith.constant 0 : index
    %19 = vector.load %arg1[%c0_5, %c0_6, %c0_7] : memref<4x32x32xf32, #tpu.memory_space<vmem>>, vector<1x32x32xf32>
    %20 = vector.shape_cast %19 : vector<1x32x32xf32> to vector<32x32xf32>
    %cst_8 = arith.constant dense<0.000000e+00> : vector<16x32xf32>
    %21 = tpu.matmul %18, %20, %cst_8 {dimension_numbers = #tpu.dot_dimension_numbers<[1], [0], [0], [1], [0, 0, 1, 1], [], []>} : vector<16x32xf32>, vector<32x32xf32>, vector<16x32xf32> -> vector<16x32xf32>
    %c0_9 = arith.constant 0 : index
    %c0_10 = arith.constant 0 : index
    %22 = vector.load %arg4[%c0_9, %c0_10] : memref<5x32xf32, #tpu.memory_space<vmem>>, vector<1x32xf32>
    %23 = vector.broadcast %22 : vector<1x32xf32> to vector<16x32xf32>
    %24 = arith.addf %21, %23 : vector<16x32xf32>
    %c1 = arith.constant 1 : index
    %c0_11 = arith.constant 0 : index
    %c0_12 = arith.constant 0 : index
    %25 = vector.load %arg1[%c1, %c0_11, %c0_12] : memref<4x32x32xf32, #tpu.memory_space<vmem>>, vector<1x32x32xf32>
    %26 = vector.shape_cast %25 : vector<1x32x32xf32> to vector<32x32xf32>
    %cst_13 = arith.constant dense<0.000000e+00> : vector<16x32xf32>
    %27 = tpu.matmul %18, %26, %cst_13 {dimension_numbers = #tpu.dot_dimension_numbers<[1], [0], [0], [1], [0, 0, 1, 1], [], []>} : vector<16x32xf32>, vector<32x32xf32>, vector<16x32xf32> -> vector<16x32xf32>
    %c1_14 = arith.constant 1 : index
    %c0_15 = arith.constant 0 : index
    %28 = vector.load %arg4[%c1_14, %c0_15] : memref<5x32xf32, #tpu.memory_space<vmem>>, vector<1x32xf32>
    %29 = vector.broadcast %28 : vector<1x32xf32> to vector<16x32xf32>
    %30 = arith.addf %27, %29 : vector<16x32xf32>
    %c2 = arith.constant 2 : index
    %c0_16 = arith.constant 0 : index
    %c0_17 = arith.constant 0 : index
    %31 = vector.load %arg1[%c2, %c0_16, %c0_17] : memref<4x32x32xf32, #tpu.memory_space<vmem>>, vector<1x32x32xf32>
    %32 = vector.shape_cast %31 : vector<1x32x32xf32> to vector<32x32xf32>
    %cst_18 = arith.constant dense<0.000000e+00> : vector<16x32xf32>
    %33 = tpu.matmul %18, %32, %cst_18 {dimension_numbers = #tpu.dot_dimension_numbers<[1], [0], [0], [1], [0, 0, 1, 1], [], []>} : vector<16x32xf32>, vector<32x32xf32>, vector<16x32xf32> -> vector<16x32xf32>
    %c2_19 = arith.constant 2 : index
    %c0_20 = arith.constant 0 : index
    %34 = vector.load %arg4[%c2_19, %c0_20] : memref<5x32xf32, #tpu.memory_space<vmem>>, vector<1x32xf32>
    %35 = vector.broadcast %34 : vector<1x32xf32> to vector<16x32xf32>
    %36 = arith.addf %33, %35 : vector<16x32xf32>
    %37 = vector.shape_cast %24 : vector<16x32xf32> to vector<2x8x4x8xf32>
    %38 = tpu.transpose %37, [0, 2, 1, 3] : vector<2x8x4x8xf32> -> vector<2x4x8x8xf32>
    %39 = vector.shape_cast %38 : vector<2x4x8x8xf32> to vector<8x8x8xf32>
    %40 = vector.shape_cast %30 : vector<16x32xf32> to vector<2x8x4x8xf32>
    %41 = tpu.transpose %40, [0, 2, 1, 3] : vector<2x8x4x8xf32> -> vector<2x4x8x8xf32>
    %42 = vector.shape_cast %41 : vector<2x4x8x8xf32> to vector<8x8x8xf32>
    %43 = vector.shape_cast %36 : vector<16x32xf32> to vector<2x8x4x8xf32>
    %44 = tpu.transpose %43, [0, 2, 1, 3] : vector<2x8x4x8xf32> -> vector<2x4x8x8xf32>
    %45 = vector.shape_cast %44 : vector<2x4x8x8xf32> to vector<8x8x8xf32>
    "tpu.trace_start"() <{level = 10 : i32, message = "btd,bsd->bts"}> : () -> ()
    %cst_21 = arith.constant dense<0.000000e+00> : vector<8x8x8xf32>
    %46 = tpu.matmul %39, %42, %cst_21 {dimension_numbers = #tpu.dot_dimension_numbers<[2], [2], [1], [1], [0, 0, 0, 1, 1, 1], [0], [0]>} : vector<8x8x8xf32>, vector<8x8x8xf32>, vector<8x8x8xf32> -> vector<8x8x8xf32>
    "tpu.trace_stop"() : () -> ()
    %47 = tpu.iota {dimensions = array<i32: 0>} : vector<8x8xi32>
    %48 = tpu.iota {dimensions = array<i32: 1>} : vector<8x8xi32>
    %49 = arith.cmpi sge, %47, %48 : vector<8x8xi32>
    %50 = vector.shape_cast %49 : vector<8x8xi1> to vector<1x8x8xi1>
    %cst_22 = arith.constant 0xFF800000 : f32
    %51 = vector.shape_cast %50 : vector<1x8x8xi1> to vector<1x8x8xi1>
    %52 = vector.broadcast %51 : vector<1x8x8xi1> to vector<8x8x8xi1>
    %53 = vector.broadcast %cst_22 : f32 to vector<8x8x8xf32>
    %54 = arith.select %52, %46, %53 : vector<8x8x8xi1>, vector<8x8x8xf32>
    %cst_23 = arith.constant dense<0xFF800000> : vector<8x8xf32>
    %55 = vector.multi_reduction <maximumf>, %54, %cst_23 [2] : vector<8x8x8xf32> to vector<8x8xf32>
    %56 = vector.shape_cast %55 : vector<8x8xf32> to vector<8x8x1xf32>
    %57 = vector.broadcast %56 : vector<8x8x1xf32> to vector<8x8x8xf32>
    %58 = arith.subf %54, %57 : vector<8x8x8xf32>
    %59 = math.exp %58 : vector<8x8x8xf32>
    %cst_24 = arith.constant dense<0.000000e+00> : vector<8x8xf32>
    %60 = vector.multi_reduction <add>, %59, %cst_24 [2] : vector<8x8x8xf32> to vector<8x8xf32>
    %61 = vector.shape_cast %60 : vector<8x8xf32> to vector<8x8x1xf32>
    %62 = tpu.reciprocal %61 : vector<8x8x1xf32> -> vector<8x8x1xf32>
    %63 = vector.broadcast %62 : vector<8x8x1xf32> to vector<8x8x8xf32>
    %64 = arith.mulf %59, %63 : vector<8x8x8xf32>
    "tpu.trace_start"() <{level = 10 : i32, message = "bts,bsd->btd"}> : () -> ()
    %cst_25 = arith.constant dense<0.000000e+00> : vector<8x8x8xf32>
    %65 = tpu.matmul %64, %45, %cst_25 {dimension_numbers = #tpu.dot_dimension_numbers<[2], [1], [1], [2], [0, 0, 0, 1, 1, 2], [0], [0]>} : vector<8x8x8xf32>, vector<8x8x8xf32>, vector<8x8x8xf32> -> vector<8x8x8xf32>
    "tpu.trace_stop"() : () -> ()
    %66 = vector.shape_cast %65 : vector<8x8x8xf32> to vector<2x4x8x8xf32>
    %67 = tpu.transpose %66, [0, 2, 1, 3] : vector<2x4x8x8xf32> -> vector<2x8x4x8xf32>
    %68 = vector.shape_cast %67 : vector<2x8x4x8xf32> to vector<16x32xf32>
    %c3 = arith.constant 3 : index
    %c0_26 = arith.constant 0 : index
    %c0_27 = arith.constant 0 : index
    %69 = vector.load %arg1[%c3, %c0_26, %c0_27] : memref<4x32x32xf32, #tpu.memory_space<vmem>>, vector<1x32x32xf32>
    %70 = vector.shape_cast %69 : vector<1x32x32xf32> to vector<32x32xf32>
    %cst_28 = arith.constant dense<0.000000e+00> : vector<16x32xf32>
    %71 = tpu.matmul %68, %70, %cst_28 {dimension_numbers = #tpu.dot_dimension_numbers<[1], [0], [0], [1], [0, 0, 1, 1], [], []>} : vector<16x32xf32>, vector<32x32xf32>, vector<16x32xf32> -> vector<16x32xf32>
    %72 = arith.addf %0, %71 : vector<16x32xf32>
    %c3_29 = arith.constant 3 : index
    %c0_30 = arith.constant 0 : index
    %73 = vector.load %arg4[%c3_29, %c0_30] : memref<5x32xf32, #tpu.memory_space<vmem>>, vector<1x32xf32>
    %74 = vector.broadcast %73 : vector<1x32xf32> to vector<16x32xf32>
    %75 = arith.addf %72, %74 : vector<16x32xf32>
    %cst_31 = arith.constant dense<0.000000e+00> : vector<16xf32>
    %76 = vector.multi_reduction <add>, %75, %cst_31 [1] : vector<16x32xf32> to vector<16xf32>
    %77 = vector.shape_cast %76 : vector<16xf32> to vector<16x1xf32>
    %cst_32 = arith.constant 3.200000e+01 : f32
    %78 = vector.broadcast %cst_32 : f32 to vector<16x1xf32>
    %79 = arith.divf %77, %78 : vector<16x1xf32>
    %80 = vector.broadcast %79 : vector<16x1xf32> to vector<16x32xf32>
    %81 = arith.subf %75, %80 : vector<16x32xf32>
    %82 = arith.mulf %81, %81 : vector<16x32xf32>
    %cst_33 = arith.constant dense<0.000000e+00> : vector<16xf32>
    %83 = vector.multi_reduction <add>, %82, %cst_33 [1] : vector<16x32xf32> to vector<16xf32>
    %84 = vector.shape_cast %83 : vector<16xf32> to vector<16x1xf32>
    %cst_34 = arith.constant 3.200000e+01 : f32
    %85 = vector.broadcast %cst_34 : f32 to vector<16x1xf32>
    %86 = arith.divf %84, %85 : vector<16x1xf32>
    %87 = vector.broadcast %79 : vector<16x1xf32> to vector<16x32xf32>
    %88 = arith.subf %75, %87 : vector<16x32xf32>
    %cst_35 = arith.constant 9.99999974E-6 : f32
    %89 = vector.broadcast %cst_35 : f32 to vector<16x1xf32>
    %90 = arith.addf %86, %89 : vector<16x1xf32>
    %91 = math.rsqrt %90 : vector<16x1xf32>
    %92 = vector.broadcast %91 : vector<16x1xf32> to vector<16x32xf32>
    %93 = arith.mulf %88, %92 : vector<16x32xf32>
    %c0_36 = arith.constant 0 : index
    %c0_37 = arith.constant 0 : index
    %94 = vector.load %arg2[%c0_36, %c0_37] : memref<32x128xf32, #tpu.memory_space<vmem>>, vector<32x128xf32>
    %cst_38 = arith.constant dense<0.000000e+00> : vector<16x128xf32>
    %95 = tpu.matmul %93, %94, %cst_38 {dimension_numbers = #tpu.dot_dimension_numbers<[1], [0], [0], [1], [0, 0, 1, 1], [], []>} : vector<16x32xf32>, vector<32x128xf32>, vector<16x128xf32> -> vector<16x128xf32>
    %c0_39 = arith.constant 0 : index
    %c0_40 = arith.constant 0 : index
    %96 = vector.load %arg5[%c0_39, %c0_40] : memref<1x128xf32, #tpu.memory_space<vmem>>, vector<1x128xf32>
    %97 = vector.broadcast %96 : vector<1x128xf32> to vector<16x128xf32>
    %98 = arith.addf %95, %97 : vector<16x128xf32>
    %cst_41 = arith.constant 5.000000e-01 : f32
    %99 = vector.broadcast %cst_41 : f32 to vector<16x128xf32>
    %100 = arith.mulf %99, %98 : vector<16x128xf32>
    %cst_42 = arith.constant 4.471500e-02 : f32
    %101 = vector.broadcast %cst_42 : f32 to vector<16x128xf32>
    %102 = arith.mulf %101, %98 : vector<16x128xf32>
    %103 = arith.mulf %102, %98 : vector<16x128xf32>
    %104 = arith.mulf %103, %98 : vector<16x128xf32>
    %105 = arith.addf %98, %104 : vector<16x128xf32>
    %cst_43 = arith.constant 0.797884583 : f32
    %106 = vector.broadcast %cst_43 : f32 to vector<16x128xf32>
    %107 = arith.mulf %106, %105 : vector<16x128xf32>
    %108 = math.tanh %107 : vector<16x128xf32>
    %cst_44 = arith.constant 1.000000e+00 : f32
    %109 = vector.broadcast %cst_44 : f32 to vector<16x128xf32>
    %110 = arith.addf %109, %108 : vector<16x128xf32>
    %111 = arith.mulf %100, %110 : vector<16x128xf32>
    %c0_45 = arith.constant 0 : index
    %c0_46 = arith.constant 0 : index
    %112 = vector.load %arg3[%c0_45, %c0_46] : memref<128x32xf32, #tpu.memory_space<vmem>>, vector<128x32xf32>
    %cst_47 = arith.constant dense<0.000000e+00> : vector<16x32xf32>
    %113 = tpu.matmul %111, %112, %cst_47 {dimension_numbers = #tpu.dot_dimension_numbers<[1], [0], [0], [1], [0, 0, 1, 1], [], []>} : vector<16x128xf32>, vector<128x32xf32>, vector<16x32xf32> -> vector<16x32xf32>
    %114 = arith.addf %75, %113 : vector<16x32xf32>
    %c4 = arith.constant 4 : index
    %c0_48 = arith.constant 0 : index
    %115 = vector.load %arg4[%c4, %c0_48] : memref<5x32xf32, #tpu.memory_space<vmem>>, vector<1x32xf32>
    %116 = vector.broadcast %115 : vector<1x32xf32> to vector<16x32xf32>
    %117 = arith.addf %114, %116 : vector<16x32xf32>
    %c0_49 = arith.constant 0 : index
    %c0_50 = arith.constant 0 : index
    %118 = vector.load %arg6[%c0_49, %c0_50] : memref<16x32xf32, #tpu.memory_space<vmem>>, vector<16x32xf32>
    tpu.vector_store %arg6[%c0_49, %c0_50], %117 {strides = array<i32>} : memref<16x32xf32, #tpu.memory_space<vmem>>, vector<16x32xf32>,
    return
  }
}

</mosaic_0001>

<llo_original>
// kernel: tpu_custom_call.1
$region0: #{tpu_custom_call.1}
  #allocation0 [shape = 'u32[]', space=smem, size = 0x4, offset = 0x4, fixed_abs, tag = 'smem constant byte address 0x4 - core index']
  #allocation1 [shape = 'u32[144,128]{1,0:T(1,128)}', space=vmem, size = 0x12000, scoped, tag = 'internal scratch']
  %s0 = inlined_call_operand.hbm [shape: f32[16,32], index: 0, kind: input, shape index: {}]
  %s1 = inlined_call_operand.vmem [shape: f32[4,32,32], index: 1, kind: input, shape index: {}]
  %s2 = inlined_call_operand.vmem [shape: f32[32,128], index: 2, kind: input, shape index: {}]
  %s3 = inlined_call_operand.vmem [shape: f32[128,32], index: 3, kind: input, shape index: {}]
  %s4 = inlined_call_operand.vmem [shape: f32[5,32], index: 4, kind: input, shape index: {}]
  %s5 = inlined_call_operand.vmem [shape: f32[1,128], index: 5, kind: input, shape index: {}]
  %s6 = inlined_call_operand.hbm [shape: f32[16,32], index: 6, kind: output, shape index: {}]
  %s7 = sld [smem:[#allocation0]]
  $region38: #{tpu_custom_call.1} parent=0
    _
  %s9 = ssub.s32 1, %s7
  %s10 = scalar_select 0, %s9, %s7
  $region1: #{tpu_custom_call.1} parent=0
    #allocation2 [shape = 'u8[8192]{0}', space=vmem, size = 0x2000, scoped, tag = 'input window, operand 0, single buffered']
    #allocation3 [shape = 's32[1]{0}', space=sflag, size = 0x4, scoped, tag = 'scoped memory for tpu_custom_call.1']
    #allocation4 [shape = 's32[1]{0}', space=sflag, size = 0x4, scoped, tag = 'scoped memory for tpu_custom_call.1']
    #allocation5 [shape = 'u8[8192]{0}', space=vmem, size = 0x2000, scoped, tag = 'output window, operand 0, single buffered']
    %11 = vsyncpa [#allocation3], 0
    %12 = vsyncpa [#allocation4], 0
    // Predicated region
    $region2: #{tpu_custom_call.1} parent=1 // pred_check
      _
    $region3: #{tpu_custom_call.1} parent=1 // pred_check_branch
      %14 = sbr.rel (0) target = $region5
    $region4: #{tpu_custom_call.1} parent=1 // pred_region
      %s16 = ssub.s32 256, 256
      %17 = vsyncadd [#allocation3], %s16
      %s18 = sshll.u32 [#allocation2], 4
      %s19 = int_to_ptr.vmem [resolvable:$true] %s18
      %24 = dma.hbm_to_vmem [thread:$0]  %s0, 256, %s19, [#allocation3], 128, 128, 8
    $region5: #{tpu_custom_call.1} parent=1 // pred_fallthru
      _
    // Predicated region
    $region6: #{tpu_custom_call.1} parent=1 // pred_check
      _
    $region7: #{tpu_custom_call.1} parent=1 // pred_check_branch
      %26 = sbr.rel (0) target = $region9
    $region8: #{tpu_custom_call.1} parent=1 // pred_region
      _
    $region9: #{tpu_custom_call.1} parent=1 // pred_fallthru
      _
    // Predicated region
    $region10: #{tpu_custom_call.1} parent=1 // pred_check
      _
    $region11: #{tpu_custom_call.1} parent=1 // pred_check_branch
      %28 = sbr.rel (0) target = $region13
    $region12: #{tpu_custom_call.1} parent=1 // pred_region
      _
    $region13: #{tpu_custom_call.1} parent=1 // pred_fallthru
      _
    // Predicated region
    $region14: #{tpu_custom_call.1} parent=1 // pred_check
      _
    $region15: #{tpu_custom_call.1} parent=1 // pred_check_branch
      %30 = sbr.rel (0) target = $region17
    $region16: #{tpu_custom_call.1} parent=1 // pred_region
      _
    $region17: #{tpu_custom_call.1} parent=1 // pred_fallthru
      _
    // Predicated region
    $region18: #{tpu_custom_call.1} parent=1 // pred_check
      _
    $region19: #{tpu_custom_call.1} parent=1 // pred_check_branch
      %32 = sbr.rel (0) target = $region21
    $region20: #{tpu_custom_call.1} parent=1 // pred_region
      _
    $region21: #{tpu_custom_call.1} parent=1 // pred_fallthru
      _
    // Predicated region
    $region22: #{tpu_custom_call.1} parent=1 // pred_check
      _
    $region23: #{tpu_custom_call.1} parent=1 // pred_check_branch
      %34 = sbr.rel (0) target = $region25
    $region24: #{tpu_custom_call.1} parent=1 // pred_region
      _
    $region25: #{tpu_custom_call.1} parent=1 // pred_fallthru
      _
    // Predicated region
    $region26: #{tpu_custom_call.1} parent=1 // pred_check
      _
    $region27: #{tpu_custom_call.1} parent=1 // pred_check_branch
      %36 = sbr.rel (0) target = $region29
    $region28: #{tpu_custom_call.1} parent=1 // pred_region
      %37 = dma.done [#allocation3], 256
    $region29: #{tpu_custom_call.1} parent=1 // pred_fallthru
      _
    %v38 = vld [vmem:[#allocation2] sm:$0xff]
    %v39 = vld [vmem:[#allocation2 + $0x8] sm:$0xff]
    %vm40 = vcmask 261120
    %v41 = vsel %vm40, %v38, 0.0
    %42 = vadd.xlane.f32.xlu0 %v41
    %v43 = vpop.xlane.xlu0 %42
    %v44 = vsel %vm40, %v39, 0.0
    %45 = vadd.xlane.f32.xlu0 %v44
    %v46 = vpop.xlane.xlu0 %45
    %v47 = vrcp.pop 32.0
    %v48 = vmul.f32 %v43, %v47
    %v49 = vmul.f32 %v46, %v47
    %v50 = vsub.f32 %v38, %v48
    %v51 = vsub.f32 %v39, %v49
    %v52 = vmul.f32 %v50, %v50
    %v53 = vmul.f32 %v51, %v51
    %v54 = vsel %vm40, %v52, 0.0
    %55 = vadd.xlane.f32.xlu0 %v54
    %v56 = vpop.xlane.xlu0 %55
    %v57 = vsel %vm40, %v53, 0.0
    %58 = vadd.xlane.f32.xlu0 %v57
    %v59 = vpop.xlane.xlu0 %58
    %v60 = vmul.f32 %v56, %v47
    %v61 = vmul.f32 %v59, %v47
    %v62 = vadd.f32 %v60, 1e-05
    %v63 = vadd.f32 %v61, 1e-05
    %v64 = vrsqrt.pop %v62
    %v65 = vrsqrt.pop %v63
    %v66 = vmul.f32 %v50, %v64
    %v67 = vmul.f32 %v51, %v65
    %v68 = vld [vmem:[%s1] sm:$0xff]
    %v69 = vld [vmem:[%s1 + $0x8] sm:$0xff]
    %v70 = vld [vmem:[%s1 + $0x10] sm:$0xff]
    %v71 = vld [vmem:[%s1 + $0x18] sm:$0xff]
    %v72 = vld [vmem:[%s4] sm:$0x1]
    %v73 = vlaneseq
    %v74 = vshrl.u32 %v73, 7
    %v75 = vsub.s32 0, %v74
    %v76 = vrot.slane %v72, %v75
    %v78 = vsel %vm40, %v66, 0
    %v81 = vsel %vm40, %v67, 0
    %83 = vmatprep.subr.mxu0 0.0
    %84 = vmatpush1.msra.mxu0 %v68
    %85 = vmatprep.subr.mxu0 0.0
    %86 = vmatpush1.msra.mxu0 %v69
    %87 = vmatprep.subr.mxu0 0.0
    %88 = vmatpush1.msra.mxu0 %v70
    %89 = vmatprep.subr.mxu0 0.0
    %90 = vmatpush1.msra.mxu0 %v71
    %91 = vmatprep.subr.mxu0 0.0
    %92 = vmatpush1.msra.mxu0 0.0
    %93 = vmatprep.subr.mxu0 0.0
    %94 = vmatpush1.msra.mxu0 0.0
    %95 = vmatprep.subr.mxu0 0.0
    %96 = vmatpush1.msra.mxu0 0.0
    %97 = vmatprep.subr.mxu0 0.0
    %98 = vmatpush1.msra.mxu0 0.0
    %99 = vmatprep.subr.mxu0 0.0
    %100 = vmatpush1.msra.mxu0 0.0
    %101 = vmatprep.subr.mxu0 0.0
    %102 = vmatpush1.msra.mxu0 0.0
    %103 = vmatprep.subr.mxu0 0.0
    %104 = vmatpush1.msra.mxu0 0.0
    %105 = vmatprep.subr.mxu0 0.0
    %106 = vmatpush1.msra.mxu0 0.0
    %107 = vmatprep.subr.mxu0 0.0
    %108 = vmatpush1.msra.mxu0 0.0
    %109 = vmatprep.subr.mxu0 0.0
    %110 = vmatpush1.msra.mxu0 0.0
    %111 = vmatprep.subr.mxu0 0.0
    %112 = vmatpush1.msra.mxu0 0.0
    %113 = vmatprep.subr.mxu0 0.0
    %114 = vmatpush1.msra.mxu0 0.0
    %115 = vmatprep.subr.mxu0 0.0
    %116 = vmatpush1.msra.mxu0 0.0
    %117 = vmatprep.subr.mxu0 0.0
    %118 = vmatpush1.msra.mxu0 0.0
    %119 = vmatprep.subr.mxu0 0.0
    %120 = vmatpush1.msra.mxu0 0.0
    %121 = vmatprep.subr.mxu0 0.0
    %122 = vmatpush1.msra.mxu0 0.0
    %123 = vmatprep.subr.mxu0 0.0
    %124 = vmatpush1.msra.mxu0 0.0
    %125 = vmatprep.subr.mxu0 0.0
    %126 = vmatpush1.msra.mxu0 0.0
    %127 = vmatprep.subr.mxu0 0.0
    %128 = vmatpush1.msra.mxu0 0.0
    %129 = vmatprep.subr.mxu0 0.0
    %130 = vmatpush1.msra.mxu0 0.0
    %131 = vmatprep.subr.mxu0 0.0
    %132 = vmatpush1.msra.mxu0 0.0
    %133 = vmatprep.subr.mxu0 0.0
    %134 = vmatpush1.msra.mxu0 0.0
    %135 = vmatprep.subr.mxu0 0.0
    %136 = vmatpush1.msra.mxu0 0.0
    %137 = vmatprep.subr.mxu0 0.0
    %138 = vmatpush1.msra.mxu0 0.0
    %139 = vmatprep.subr.mxu0 0.0
    %140 = vmatpush1.msra.mxu0 0.0
    %141 = vmatprep.subr.mxu0 0.0
    %142 = vmatpush1.msra.mxu0 0.0
    %143 = vmatprep.subr.mxu0 0.0
    %144 = vmatpush1.msra.mxu0 0.0
    %145 = vmatprep.subr.mxu0 0.0
    %146 = vmatpush1.msra.mxu0 0.0
    %147 = vmatprep.mubr.f32.mxu0 0.0
    %148 = vmatmul.mubr.f32.gmra.mrb[0].mxu0 %v78
    %v149 = vpop.f32.mrb[0].mxu0
    %v150 = vadd.f32 %v76, %v149
    %v151 = vpop.f32.mrb[0].mxu0
    %152 = vmatprep.mubr.f32.mxu0 0.0
    %153 = vmatmul.mubr.f32.gmra.mrb[0].mxu0 %v81
    %v154 = vpop.f32.mrb[0].mxu0
    %v155 = vadd.f32 %v76, %v154
    %v156 = vpop.f32.mrb[0].mxu0
    %157 = vdwg.mxu0
    %s158 = scalar_lea.vmem %s1, 32
    %v159 = vld [vmem:[%s158] sm:$0xff]
    %v160 = vld [vmem:[%s158 + $0x8] sm:$0xff]
    %v161 = vld [vmem:[%s158 + $0x10] sm:$0xff]
    %v162 = vld [vmem:[%s158 + $0x18] sm:$0xff]
    %v163 = vld [vmem:[%s4 + $0x1] sm:$0x1]
    %v164 = vlaneseq
    %v165 = vshrl.u32 %v164, 7
    %v166 = vsub.s32 0, %v165
    %v167 = vrot.slane %v163, %v166
    %168 = vmatprep.subr.mxu0 0.0
    %169 = vmatpush1.msra.mxu0 %v159
    %170 = vmatprep.subr.mxu0 0.0
    %171 = vmatpush1.msra.mxu0 %v160
    %172 = vmatprep.subr.mxu0 0.0
    %173 = vmatpush1.msra.mxu0 %v161
    %174 = vmatprep.subr.mxu0 0.0
    %175 = vmatpush1.msra.mxu0 %v162
    %176 = vmatprep.subr.mxu0 0.0
    %177 = vmatpush1.msra.mxu0 0.0
    %178 = vmatprep.subr.mxu0 0.0
    %179 = vmatpush1.msra.mxu0 0.0
    %180 = vmatprep.subr.mxu0 0.0
    %181 = vmatpush1.msra.mxu0 0.0
    %182 = vmatprep.subr.mxu0 0.0
    %183 = vmatpush1.msra.mxu0 0.0
    %184 = vmatprep.subr.mxu0 0.0
    %185 = vmatpush1.msra.mxu0 0.0
    %186 = vmatprep.subr.mxu0 0.0
    %187 = vmatpush1.msra.mxu0 0.0
    %188 = vmatprep.subr.mxu0 0.0
    %189 = vmatpush1.msra.mxu0 0.0
    %190 = vmatprep.subr.mxu0 0.0
    %191 = vmatpush1.msra.mxu0 0.0
    %192 = vmatprep.subr.mxu0 0.0
    %193 = vmatpush1.msra.mxu0 0.0
    %194 = vmatprep.subr.mxu0 0.0
    %195 = vmatpush1.msra.mxu0 0.0
    %196 = vmatprep.subr.mxu0 0.0
    %197 = vmatpush1.msra.mxu0 0.0
    %198 = vmatprep.subr.mxu0 0.0
    %199 = vmatpush1.msra.mxu0 0.0
    %200 = vmatprep.subr.mxu0 0.0
    %201 = vmatpush1.msra.mxu0 0.0
    %202 = vmatprep.subr.mxu0 0.0
    %203 = vmatpush1.msra.mxu0 0.0
    %204 = vmatprep.subr.mxu0 0.0
    %205 = vmatpush1.msra.mxu0 0.0
    %206 = vmatprep.subr.mxu0 0.0
    %207 = vmatpush1.msra.mxu0 0.0
    %208 = vmatprep.subr.mxu0 0.0
    %209 = vmatpush1.msra.mxu0 0.0
    %210 = vmatprep.subr.mxu0 0.0
    %211 = vmatpush1.msra.mxu0 0.0
    %212 = vmatprep.subr.mxu0 0.0
    %213 = vmatpush1.msra.mxu0 0.0
    %214 = vmatprep.subr.mxu0 0.0
    %215 = vmatpush1.msra.mxu0 0.0
    %216 = vmatprep.subr.mxu0 0.0
    %217 = vmatpush1.msra.mxu0 0.0
    %218 = vmatprep.subr.mxu0 0.0
    %219 = vmatpush1.msra.mxu0 0.0
    %220 = vmatprep.subr.mxu0 0.0
    %221 = vmatpush1.msra.mxu0 0.0
    %222 = vmatprep.subr.mxu0 0.0
    %223 = vmatpush1.msra.mxu0 0.0
    %224 = vmatprep.subr.mxu0 0.0
    %225 = vmatpush1.msra.mxu0 0.0
    %226 = vmatprep.subr.mxu0 0.0
    %227 = vmatpush1.msra.mxu0 0.0
    %228 = vmatprep.subr.mxu0 0.0
    %229 = vmatpush1.msra.mxu0 0.0
    %230 = vmatprep.subr.mxu0 0.0
    %231 = vmatpush1.msra.mxu0 0.0
    %232 = vmatprep.mubr.f32.mxu0 0.0
    %233 = vmatmul.mubr.f32.gmra.mrb[0].mxu0 %v78
    %v234 = vpop.f32.mrb[0].mxu0
    %v235 = vadd.f32 %v167, %v234
    %v236 = vpop.f32.mrb[0].mxu0
    %237 = vmatprep.mubr.f32.mxu0 0.0
    %238 = vmatmul.mubr.f32.gmra.mrb[0].mxu0 %v81
    %v239 = vpop.f32.mrb[0].mxu0
    %v240 = vadd.f32 %v167, %v239
    %v241 = vpop.f32.mrb[0].mxu0
    %242 = vdwg.mxu0
    %s243 = scalar_lea.vmem %s1, 64
    %v244 = vld [vmem:[%s243] sm:$0xff]
    %v245 = vld [vmem:[%s243 + $0x8] sm:$0xff]
    %v246 = vld [vmem:[%s243 + $0x10] sm:$0xff]
    %v247 = vld [vmem:[%s243 + $0x18] sm:$0xff]
    %v248 = vld [vmem:[%s4 + $0x2] sm:$0x1]
    %v249 = vlaneseq
    %v250 = vshrl.u32 %v249, 7
    %v251 = vsub.s32 0, %v250
    %v252 = vrot.slane %v248, %v251
    %253 = vmatprep.subr.mxu0 0.0
    %254 = vmatpush1.msra.mxu0 %v244
    %255 = vmatprep.subr.mxu0 0.0
    %256 = vmatpush1.msra.mxu0 %v245
    %257 = vmatprep.subr.mxu0 0.0
    %258 = vmatpush1.msra.mxu0 %v246
    %259 = vmatprep.subr.mxu0 0.0
    %260 = vmatpush1.msra.mxu0 %v247
    %261 = vmatprep.subr.mxu0 0.0
    %262 = vmatpush1.msra.mxu0 0.0
    %263 = vmatprep.subr.mxu0 0.0
    %264 = vmatpush1.msra.mxu0 0.0
    %265 = vmatprep.subr.mxu0 0.0
    %266 = vmatpush1.msra.mxu0 0.0
    %267 = vmatprep.subr.mxu0 0.0
    %268 = vmatpush1.msra.mxu0 0.0
    %269 = vmatprep.subr.mxu0 0.0
    %270 = vmatpush1.msra.mxu0 0.0
    %271 = vmatprep.subr.mxu0 0.0
    %272 = vmatpush1.msra.mxu0 0.0
    %273 = vmatprep.subr.mxu0 0.0
    %274 = vmatpush1.msra.mxu0 0.0
    %275 = vmatprep.subr.mxu0 0.0
    %276 = vmatpush1.msra.mxu0 0.0
    %277 = vmatprep.subr.mxu0 0.0
    %278 = vmatpush1.msra.mxu0 0.0
    %279 = vmatprep.subr.mxu0 0.0
    %280 = vmatpush1.msra.mxu0 0.0
    %281 = vmatprep.subr.mxu0 0.0
    %282 = vmatpush1.msra.mxu0 0.0
    %283 = vmatprep.subr.mxu0 0.0
    %284 = vmatpush1.msra.mxu0 0.0
    %285 = vmatprep.subr.mxu0 0.0
    %286 = vmatpush1.msra.mxu0 0.0
    %287 = vmatprep.subr.mxu0 0.0
    %288 = vmatpush1.msra.mxu0 0.0
    %289 = vmatprep.subr.mxu0 0.0
    %290 = vmatpush1.msra.mxu0 0.0
    %291 = vmatprep.subr.mxu0 0.0
    %292 = vmatpush1.msra.mxu0 0.0
    %293 = vmatprep.subr.mxu0 0.0
    %294 = vmatpush1.msra.mxu0 0.0
    %295 = vmatprep.subr.mxu0 0.0
    %296 = vmatpush1.msra.mxu0 0.0
    %297 = vmatprep.subr.mxu0 0.0
    %298 = vmatpush1.msra.mxu0 0.0
    %299 = vmatprep.subr.mxu0 0.0
    %300 = vmatpush1.msra.mxu0 0.0
    %301 = vmatprep.subr.mxu0 0.0
    %302 = vmatpush1.msra.mxu0 0.0
    %303 = vmatprep.subr.mxu0 0.0
    %304 = vmatpush1.msra.mxu0 0.0
    %305 = vmatprep.subr.mxu0 0.0
    %306 = vmatpush1.msra.mxu0 0.0
    %307 = vmatprep.subr.mxu0 0.0
    %308 = vmatpush1.msra.mxu0 0.0
    %309 = vmatprep.subr.mxu0 0.0
    %310 = vmatpush1.msra.mxu0 0.0
    %311 = vmatprep.subr.mxu0 0.0
    %312 = vmatpush1.msra.mxu0 0.0
    %313 = vmatprep.subr.mxu0 0.0
    %314 = vmatpush1.msra.mxu0 0.0
    %315 = vmatprep.subr.mxu0 0.0
    %316 = vmatpush1.msra.mxu0 0.0
    %317 = vmatprep.mubr.f32.mxu0 0.0
    %318 = vmatmul.mubr.f32.gmra.mrb[0].mxu0 %v78
    %v319 = vpop.f32.mrb[0].mxu0
    %v320 = vadd.f32 %v252, %v319
    %v321 = vpop.f32.mrb[0].mxu0
    %322 = vmatprep.mubr.f32.mxu0 0.0
    %323 = vmatmul.mubr.f32.gmra.mrb[0].mxu0 %v81
    %v324 = vpop.f32.mrb[0].mxu0
    %v325 = vadd.f32 %v252, %v324
    %v326 = vpop.f32.mrb[0].mxu0
    %327 = vdwg.mxu0
    %330 = vrot.lane.b32.xlu0 %v150, 120
    %v331 = vpop.permute.xlu0 %330
    %332 = vrot.lane.b32.xlu0 %v155, 120
    %v333 = vpop.permute.xlu0 %332
    %336 = vrot.lane.b32.xlu0 %v150, 112
    %v337 = vpop.permute.xlu0 %336
    %338 = vrot.lane.b32.xlu0 %v155, 112
    %v339 = vpop.permute.xlu0 %338
    %342 = vrot.lane.b32.xlu0 %v150, 104
    %v343 = vpop.permute.xlu0 %342
    %344 = vrot.lane.b32.xlu0 %v155, 104
    %v345 = vpop.permute.xlu0 %344
    %v348 = vcombine.low %v150, %v337
    %v349 = vcombine.high %v150, %v337
    %v351 = vunpack.c.l.s4 1983009808
    %v352 = vunpack.c.0.s8 %v351
    %v353 = vlaneseq
    %v354 = vshrl.u32 %v353, 7
    %v355 = vsub.s32 %v352, %v354
    %v356 = vrot.slane %v348, %v355
    %v358 = vunpack.c.l.s4 1983009808
    %v359 = vunpack.c.0.s8 %v358
    %v360 = vlaneseq
    %v361 = vshrl.u32 %v360, 7
    %v362 = vsub.s32 %v359, %v361
    %v363 = vrot.slane %v349, %v362
    %v364 = vcombine.low %v331, %v343
    %v365 = vcombine.high %v331, %v343
    %v367 = vunpack.c.l.s4 1983009808
    %v368 = vunpack.c.0.s8 %v367
    %v369 = vlaneseq
    %v370 = vshrl.u32 %v369, 7
    %v371 = vsub.s32 %v368, %v370
    %v372 = vrot.slane %v364, %v371
    %v374 = vunpack.c.l.s4 1983009808
    %v375 = vunpack.c.0.s8 %v374
    %v376 = vlaneseq
    %v377 = vshrl.u32 %v376, 7
    %v378 = vsub.s32 %v375, %v377
    %v379 = vrot.slane %v365, %v378
    %v380 = vcombine.low %v356, %v372
    %v381 = vcombine.high %v356, %v372
    %v383 = vunpack.c.l.s4 1934713408
    %v384 = vunpack.c.0.s8 %v383
    %v385 = vlaneseq
    %v386 = vshrl.u32 %v385, 7
    %v387 = vsub.s32 %v384, %v386
    %v388 = vrot.slane %v380, %v387
    %v390 = vunpack.c.l.s4 1934713408
    %v391 = vunpack.c.0.s8 %v390
    %v392 = vlaneseq
    %v393 = vshrl.u32 %v392, 7
    %v394 = vsub.s32 %v391, %v393
    %v395 = vrot.slane %v381, %v394
    %v396 = vcombine.low %v363, %v379
    %v397 = vcombine.high %v363, %v379
    %v399 = vunpack.c.l.s4 1934713408
    %v400 = vunpack.c.0.s8 %v399
    %v401 = vlaneseq
    %v402 = vshrl.u32 %v401, 7
    %v403 = vsub.s32 %v400, %v402
    %v404 = vrot.slane %v396, %v403
    %v406 = vunpack.c.l.s4 1934713408
    %v407 = vunpack.c.0.s8 %v406
    %v408 = vlaneseq
    %v409 = vshrl.u32 %v408, 7
    %v410 = vsub.s32 %v407, %v409
    %v411 = vrot.slane %v397, %v410
    %v412 = vcombine.high %v388, 0.0
    %v413 = vcombine.high %v395, 0.0
    %v414 = vcombine.high %v404, 0.0
    %v415 = vcombine.high %v411, 0.0
    %v416 = vcombine.low %v155, %v339
    %v417 = vcombine.high %v155, %v339
    %v419 = vunpack.c.l.s4 1983009808
    %v420 = vunpack.c.0.s8 %v419
    %v421 = vlaneseq
    %v422 = vshrl.u32 %v421, 7
    %v423 = vsub.s32 %v420, %v422
    %v424 = vrot.slane %v416, %v423
    %v426 = vunpack.c.l.s4 1983009808
    %v427 = vunpack.c.0.s8 %v426
    %v428 = vlaneseq
    %v429 = vshrl.u32 %v428, 7
    %v430 = vsub.s32 %v427, %v429
    %v431 = vrot.slane %v417, %v430
    %v432 = vcombine.low %v333, %v345
    %v433 = vcombine.high %v333, %v345
    %v435 = vunpack.c.l.s4 1983009808
    %v436 = vunpack.c.0.s8 %v435
    %v437 = vlaneseq
    %v438 = vshrl.u32 %v437, 7
    %v439 = vsub.s32 %v436, %v438
    %v440 = vrot.slane %v432, %v439
    %v442 = vunpack.c.l.s4 1983009808
    %v443 = vunpack.c.0.s8 %v442
    %v444 = vlaneseq
    %v445 = vshrl.u32 %v444, 7
    %v446 = vsub.s32 %v443, %v445
    %v447 = vrot.slane %v433, %v446
    %v448 = vcombine.low %v424, %v440
    %v449 = vcombine.high %v424, %v440
    %v451 = vunpack.c.l.s4 1934713408
    %v452 = vunpack.c.0.s8 %v451
    %v453 = vlaneseq
    %v454 = vshrl.u32 %v453, 7
    %v455 = vsub.s32 %v452, %v454
    %v456 = vrot.slane %v448, %v455
    %v458 = vunpack.c.l.s4 1934713408
    %v459 = vunpack.c.0.s8 %v458
    %v460 = vlaneseq
    %v461 = vshrl.u32 %v460, 7
    %v462 = vsub.s32 %v459, %v461
    %v463 = vrot.slane %v449, %v462
    %v464 = vcombine.low %v431, %v447
    %v465 = vcombine.high %v431, %v447
    %v467 = vunpack.c.l.s4 1934713408
    %v468 = vunpack.c.0.s8 %v467
    %v469 = vlaneseq
    %v470 = vshrl.u32 %v469, 7
    %v471 = vsub.s32 %v468, %v470
    %v472 = vrot.slane %v464, %v471
    %v474 = vunpack.c.l.s4 1934713408
    %v475 = vunpack.c.0.s8 %v474
    %v476 = vlaneseq
    %v477 = vshrl.u32 %v476, 7
    %v478 = vsub.s32 %v475, %v477
    %v479 = vrot.slane %v465, %v478
    %v480 = vcombine.high %v456, 0.0
    %v481 = vcombine.high %v463, 0.0
    %v482 = vcombine.high %v472, 0.0
    %v483 = vcombine.high %v479, 0.0
    %v484 = vcombine.low %v388, %v395
    %v486 = vunpack.c.l.s4 1983009808
    %v487 = vunpack.c.0.s8 %v486
    %v488 = vlaneseq
    %v489 = vshrl.u32 %v488, 7
    %v490 = vsub.s32 %v487, %v489
    %v491 = vrot.slane %v484, %v490
    %v492 = vcombine.low %v412, %v413
    %v494 = vunpack.c.l.s4 1983009808
    %v495 = vunpack.c.0.s8 %v494
    %v496 = vlaneseq
    %v497 = vshrl.u32 %v496, 7
    %v498 = vsub.s32 %v495, %v497
    %v499 = vrot.slane %v492, %v498
    %v500 = vcombine.low %v404, %v411
    %v502 = vunpack.c.l.s4 1983009808
    %v503 = vunpack.c.0.s8 %v502
    %v504 = vlaneseq
    %v505 = vshrl.u32 %v504, 7
    %v506 = vsub.s32 %v503, %v505
    %v507 = vrot.slane %v500, %v506
    %v508 = vcombine.low %v414, %v415
    %v510 = vunpack.c.l.s4 1983009808
    %v511 = vunpack.c.0.s8 %v510
    %v512 = vlaneseq
    %v513 = vshrl.u32 %v512, 7
    %v514 = vsub.s32 %v511, %v513
    %v515 = vrot.slane %v508, %v514
    %v516 = vcombine.low %v491, %v499
    %v517 = vcombine.high %v491, %v499
    %v519 = vunpack.c.l.s4 1934713408
    %v520 = vunpack.c.0.s8 %v519
    %v521 = vlaneseq
    %v522 = vshrl.u32 %v521, 7
    %v523 = vsub.s32 %v520, %v522
    %v524 = vrot.slane %v516, %v523
    %v526 = vunpack.c.l.s4 1934713408
    %v527 = vunpack.c.0.s8 %v526
    %v528 = vlaneseq
    %v529 = vshrl.u32 %v528, 7
    %v530 = vsub.s32 %v527, %v529
    %v531 = vrot.slane %v517, %v530
    %v532 = vcombine.low %v507, %v515
    %v533 = vcombine.high %v507, %v515
    %v535 = vunpack.c.l.s4 1934713408
    %v536 = vunpack.c.0.s8 %v535
    %v537 = vlaneseq
    %v538 = vshrl.u32 %v537, 7
    %v539 = vsub.s32 %v536, %v538
    %v540 = vrot.slane %v532, %v539
    %v542 = vunpack.c.l.s4 1934713408
    %v543 = vunpack.c.0.s8 %v542
    %v544 = vlaneseq
    %v545 = vshrl.u32 %v544, 7
    %v546 = vsub.s32 %v543, %v545
    %v547 = vrot.slane %v533, %v546
    %v548 = vcombine.low %v524, %v540
    %v549 = vcombine.high %v524, %v540
    %v550 = vcombine.low %v531, %v547
    %v551 = vcombine.high %v531, %v547
    %v552 = vcombine.low %v456, %v463
    %v554 = vunpack.c.l.s4 1983009808
    %v555 = vunpack.c.0.s8 %v554
    %v556 = vlaneseq
    %v557 = vshrl.u32 %v556, 7
    %v558 = vsub.s32 %v555, %v557
    %v559 = vrot.slane %v552, %v558
    %v560 = vcombine.low %v480, %v481
    %v562 = vunpack.c.l.s4 1983009808
    %v563 = vunpack.c.0.s8 %v562
    %v564 = vlaneseq
    %v565 = vshrl.u32 %v564, 7
    %v566 = vsub.s32 %v563, %v565
    %v567 = vrot.slane %v560, %v566
    %v568 = vcombine.low %v472, %v479
    %v570 = vunpack.c.l.s4 1983009808
    %v571 = vunpack.c.0.s8 %v570
    %v572 = vlaneseq
    %v573 = vshrl.u32 %v572, 7
    %v574 = vsub.s32 %v571, %v573
    %v575 = vrot.slane %v568, %v574
    %v576 = vcombine.low %v482, %v483
    %v578 = vunpack.c.l.s4 1983009808
    %v579 = vunpack.c.0.s8 %v578
    %v580 = vlaneseq
    %v581 = vshrl.u32 %v580, 7
    %v582 = vsub.s32 %v579, %v581
    %v583 = vrot.slane %v576, %v582
    %v584 = vcombine.low %v559, %v567
    %v585 = vcombine.high %v559, %v567
    %v587 = vunpack.c.l.s4 1934713408
    %v588 = vunpack.c.0.s8 %v587
    %v589 = vlaneseq
    %v590 = vshrl.u32 %v589, 7
    %v591 = vsub.s32 %v588, %v590
    %v592 = vrot.slane %v584, %v591
    %v594 = vunpack.c.l.s4 1934713408
    %v595 = vunpack.c.0.s8 %v594
    %v596 = vlaneseq
    %v597 = vshrl.u32 %v596, 7
    %v598 = vsub.s32 %v595, %v597
    %v599 = vrot.slane %v585, %v598
    %v600 = vcombine.low %v575, %v583
    %v601 = vcombine.high %v575, %v583
    %v603 = vunpack.c.l.s4 1934713408
    %v604 = vunpack.c.0.s8 %v603
    %v605 = vlaneseq
    %v606 = vshrl.u32 %v605, 7
    %v607 = vsub.s32 %v604, %v606
    %v608 = vrot.slane %v600, %v607
    %v610 = vunpack.c.l.s4 1934713408
    %v611 = vunpack.c.0.s8 %v610
    %v612 = vlaneseq
    %v613 = vshrl.u32 %v612, 7
    %v614 = vsub.s32 %v611, %v613
    %v615 = vrot.slane %v601, %v614
    %v616 = vcombine.low %v592, %v608
    %v617 = vcombine.high %v592, %v608
    %v618 = vcombine.low %v599, %v615
    %v619 = vcombine.high %v599, %v615
    %622 = vrot.lane.b32.xlu0 %v235, 120
    %v623 = vpop.permute.xlu0 %622
    %624 = vrot.lane.b32.xlu0 %v240, 120
    %v625 = vpop.permute.xlu0 %624
    %628 = vrot.lane.b32.xlu0 %v235, 112
    %v629 = vpop.permute.xlu0 %628
    %630 = vrot.lane.b32.xlu0 %v240, 112
    %v631 = vpop.permute.xlu0 %630
    %634 = vrot.lane.b32.xlu0 %v235, 104
    %v635 = vpop.permute.xlu0 %634
    %636 = vrot.lane.b32.xlu0 %v240, 104
    %v637 = vpop.permute.xlu0 %636
    %v640 = vcombine.low %v235, %v629
    %v641 = vcombine.high %v235, %v629
    %v643 = vunpack.c.l.s4 1983009808
    %v644 = vunpack.c.0.s8 %v643
    %v645 = vlaneseq
    %v646 = vshrl.u32 %v645, 7
    %v647 = vsub.s32 %v644, %v646
    %v648 = vrot.slane %v640, %v647
    %v650 = vunpack.c.l.s4 1983009808
    %v651 = vunpack.c.0.s8 %v650
    %v652 = vlaneseq
    %v653 = vshrl.u32 %v652, 7
    %v654 = vsub.s32 %v651, %v653
    %v655 = vrot.slane %v641, %v654
    %v656 = vcombine.low %v623, %v635
    %v657 = vcombine.high %v623, %v635
    %v659 = vunpack.c.l.s4 1983009808
    %v660 = vunpack.c.0.s8 %v659
    %v661 = vlaneseq
    %v662 = vshrl.u32 %v661, 7
    %v663 = vsub.s32 %v660, %v662
    %v664 = vrot.slane %v656, %v663
    %v666 = vunpack.c.l.s4 1983009808
    %v667 = vunpack.c.0.s8 %v666
    %v668 = vlaneseq
    %v669 = vshrl.u32 %v668, 7
    %v670 = vsub.s32 %v667, %v669
    %v671 = vrot.slane %v657, %v670
    %v672 = vcombine.low %v648, %v664
    %v673 = vcombine.high %v648, %v664
    %v675 = vunpack.c.l.s4 1934713408
    %v676 = vunpack.c.0.s8 %v675
    %v677 = vlaneseq
    %v678 = vshrl.u32 %v677, 7
    %v679 = vsub.s32 %v676, %v678
    %v680 = vrot.slane %v672, %v679
    %v682 = vunpack.c.l.s4 1934713408
    %v683 = vunpack.c.0.s8 %v682
    %v684 = vlaneseq
    %v685 = vshrl.u32 %v684, 7
    %v686 = vsub.s32 %v683, %v685
    %v687 = vrot.slane %v673, %v686
    %v688 = vcombine.low %v655, %v671
    %v689 = vcombine.high %v655, %v671
    %v691 = vunpack.c.l.s4 1934713408
    %v692 = vunpack.c.0.s8 %v691
    %v693 = vlaneseq
    %v694 = vshrl.u32 %v693, 7
    %v695 = vsub.s32 %v692, %v694
    %v696 = vrot.slane %v688, %v695
    %v698 = vunpack.c.l.s4 1934713408
    %v699 = vunpack.c.0.s8 %v698
    %v700 = vlaneseq
    %v701 = vshrl.u32 %v700, 7
    %v702 = vsub.s32 %v699, %v701
    %v703 = vrot.slane %v689, %v702
    %v704 = vcombine.high %v680, 0.0
    %v705 = vcombine.high %v687, 0.0
    %v706 = vcombine.high %v696, 0.0
    %v707 = vcombine.high %v703, 0.0
    %v708 = vcombine.low %v240, %v631
    %v709 = vcombine.high %v240, %v631
    %v711 = vunpack.c.l.s4 1983009808
    %v712 = vunpack.c.0.s8 %v711
    %v713 = vlaneseq
    %v714 = vshrl.u32 %v713, 7
    %v715 = vsub.s32 %v712, %v714
    %v716 = vrot.slane %v708, %v715
    %v718 = vunpack.c.l.s4 1983009808
    %v719 = vunpack.c.0.s8 %v718
    %v720 = vlaneseq
    %v721 = vshrl.u32 %v720, 7
    %v722 = vsub.s32 %v719, %v721
    %v723 = vrot.slane %v709, %v722
    %v724 = vcombine.low %v625, %v637
    %v725 = vcombine.high %v625, %v637
    %v727 = vunpack.c.l.s4 1983009808
    %v728 = vunpack.c.0.s8 %v727
    %v729 = vlaneseq
    %v730 = vshrl.u32 %v729, 7
    %v731 = vsub.s32 %v728, %v730
    %v732 = vrot.slane %v724, %v731
    %v734 = vunpack.c.l.s4 1983009808
    %v735 = vunpack.c.0.s8 %v734
    %v736 = vlaneseq
    %v737 = vshrl.u32 %v736, 7
    %v738 = vsub.s32 %v735, %v737
    %v739 = vrot.slane %v725, %v738
    %v740 = vcombine.low %v716, %v732
    %v741 = vcombine.high %v716, %v732
    %v743 = vunpack.c.l.s4 1934713408
    %v744 = vunpack.c.0.s8 %v743
    %v745 = vlaneseq
    %v746 = vshrl.u32 %v745, 7
    %v747 = vsub.s32 %v744, %v746
    %v748 = vrot.slane %v740, %v747
    %v750 = vunpack.c.l.s4 1934713408
    %v751 = vunpack.c.0.s8 %v750
    %v752 = vlaneseq
    %v753 = vshrl.u32 %v752, 7
    %v754 = vsub.s32 %v751, %v753
    %v755 = vrot.slane %v741, %v754
    %v756 = vcombine.low %v723, %v739
    %v757 = vcombine.high %v723, %v739
    %v759 = vunpack.c.l.s4 1934713408
    %v760 = vunpack.c.0.s8 %v759
    %v761 = vlaneseq
    %v762 = vshrl.u32 %v761, 7
    %v763 = vsub.s32 %v760, %v762
    %v764 = vrot.slane %v756, %v763
    %v766 = vunpack.c.l.s4 1934713408
    %v767 = vunpack.c.0.s8 %v766
    %v768 = vlaneseq
    %v769 = vshrl.u32 %v768, 7
    %v770 = vsub.s32 %v767, %v769
    %v771 = vrot.slane %v757, %v770
    %v772 = vcombine.high %v748, 0.0
    %v773 = vcombine.high %v755, 0.0
    %v774 = vcombine.high %v764, 0.0
    %v775 = vcombine.high %v771, 0.0
    %v776 = vcombine.low %v680, %v687
    %v778 = vunpack.c.l.s4 1983009808
    %v779 = vunpack.c.0.s8 %v778
    %v780 = vlaneseq
    %v781 = vshrl.u32 %v780, 7
    %v782 = vsub.s32 %v779, %v781
    %v783 = vrot.slane %v776, %v782
    %v784 = vcombine.low %v704, %v705
    %v786 = vunpack.c.l.s4 1983009808
    %v787 = vunpack.c.0.s8 %v786
    %v788 = vlaneseq
    %v789 = vshrl.u32 %v788, 7
    %v790 = vsub.s32 %v787, %v789
    %v791 = vrot.slane %v784, %v790
    %v792 = vcombine.low %v696, %v703
    %v794 = vunpack.c.l.s4 1983009808
    %v795 = vunpack.c.0.s8 %v794
    %v796 = vlaneseq
    %v797 = vshrl.u32 %v796, 7
    %v798 = vsub.s32 %v795, %v797
    %v799 = vrot.slane %v792, %v798
    %v800 = vcombine.low %v706, %v707
    %v802 = vunpack.c.l.s4 1983009808
    %v803 = vunpack.c.0.s8 %v802
    %v804 = vlaneseq
    %v805 = vshrl.u32 %v804, 7
    %v806 = vsub.s32 %v803, %v805
    %v807 = vrot.slane %v800, %v806
    %v808 = vcombine.low %v783, %v791
    %v809 = vcombine.high %v783, %v791
    %v811 = vunpack.c.l.s4 1934713408
    %v812 = vunpack.c.0.s8 %v811
    %v813 = vlaneseq
    %v814 = vshrl.u32 %v813, 7
    %v815 = vsub.s32 %v812, %v814
    %v816 = vrot.slane %v808, %v815
    %v818 = vunpack.c.l.s4 1934713408
    %v819 = vunpack.c.0.s8 %v818
    %v820 = vlaneseq
    %v821 = vshrl.u32 %v820, 7
    %v822 = vsub.s32 %v819, %v821
    %v823 = vrot.slane %v809, %v822
    %v824 = vcombine.low %v799, %v807
    %v825 = vcombine.high %v799, %v807
    %v827 = vunpack.c.l.s4 1934713408
    %v828 = vunpack.c.0.s8 %v827
    %v829 = vlaneseq
    %v830 = vshrl.u32 %v829, 7
    %v831 = vsub.s32 %v828, %v830
    %v832 = vrot.slane %v824, %v831
    %v834 = vunpack.c.l.s4 1934713408
    %v835 = vunpack.c.0.s8 %v834
    %v836 = vlaneseq
    %v837 = vshrl.u32 %v836, 7
    %v838 = vsub.s32 %v835, %v837
    %v839 = vrot.slane %v825, %v838
    %v840 = vcombine.low %v816, %v832
    %v841 = vcombine.high %v816, %v832
    %v842 = vcombine.low %v823, %v839
    %v843 = vcombine.high %v823, %v839
    %v844 = vcombine.low %v748, %v755
    %v846 = vunpack.c.l.s4 1983009808
    %v847 = vunpack.c.0.s8 %v846
    %v848 = vlaneseq
    %v849 = vshrl.u32 %v848, 7
    %v850 = vsub.s32 %v847, %v849
    %v851 = vrot.slane %v844, %v850
    %v852 = vcombine.low %v772, %v773
    %v854 = vunpack.c.l.s4 1983009808
    %v855 = vunpack.c.0.s8 %v854
    %v856 = vlaneseq
    %v857 = vshrl.u32 %v856, 7
    %v858 = vsub.s32 %v855, %v857
    %v859 = vrot.slane %v852, %v858
    %v860 = vcombine.low %v764, %v771
    %v862 = vunpack.c.l.s4 1983009808
    %v863 = vunpack.c.0.s8 %v862
    %v864 = vlaneseq
    %v865 = vshrl.u32 %v864, 7
    %v866 = vsub.s32 %v863, %v865
    %v867 = vrot.slane %v860, %v866
    %v868 = vcombine.low %v774, %v775
    %v870 = vunpack.c.l.s4 1983009808
    %v871 = vunpack.c.0.s8 %v870
    %v872 = vlaneseq
    %v873 = vshrl.u32 %v872, 7
    %v874 = vsub.s32 %v871, %v873
    %v875 = vrot.slane %v868, %v874
    %v876 = vcombine.low %v851, %v859
    %v877 = vcombine.high %v851, %v859
    %v879 = vunpack.c.l.s4 1934713408
    %v880 = vunpack.c.0.s8 %v879
    %v881 = vlaneseq
    %v882 = vshrl.u32 %v881, 7
    %v883 = vsub.s32 %v880, %v882
    %v884 = vrot.slane %v876, %v883
    %v886 = vunpack.c.l.s4 1934713408
    %v887 = vunpack.c.0.s8 %v886
    %v888 = vlaneseq
    %v889 = vshrl.u32 %v888, 7
    %v890 = vsub.s32 %v887, %v889
    %v891 = vrot.slane %v877, %v890
    %v892 = vcombine.low %v867, %v875
    %v893 = vcombine.high %v867, %v875
    %v895 = vunpack.c.l.s4 1934713408
    %v896 = vunpack.c.0.s8 %v895
    %v897 = vlaneseq
    %v898 = vshrl.u32 %v897, 7
    %v899 = vsub.s32 %v896, %v898
    %v900 = vrot.slane %v892, %v899
    %v902 = vunpack.c.l.s4 1934713408
    %v903 = vunpack.c.0.s8 %v902
    %v904 = vlaneseq
    %v905 = vshrl.u32 %v904, 7
    %v906 = vsub.s32 %v903, %v905
    %v907 = vrot.slane %v893, %v906
    %v908 = vcombine.low %v884, %v900
    %v909 = vcombine.high %v884, %v900
    %v910 = vcombine.low %v891, %v907
    %v911 = vcombine.high %v891, %v907
    %914 = vrot.lane.b32.xlu0 %v320, 120
    %v915 = vpop.permute.xlu0 %914
    %916 = vrot.lane.b32.xlu0 %v325, 120
    %v917 = vpop.permute.xlu0 %916
    %920 = vrot.lane.b32.xlu0 %v320, 112
    %v921 = vpop.permute.xlu0 %920
    %922 = vrot.lane.b32.xlu0 %v325, 112
    %v923 = vpop.permute.xlu0 %922
    %926 = vrot.lane.b32.xlu0 %v320, 104
    %v927 = vpop.permute.xlu0 %926
    %928 = vrot.lane.b32.xlu0 %v325, 104
    %v929 = vpop.permute.xlu0 %928
    %v932 = vcombine.low %v320, %v921
    %v933 = vcombine.high %v320, %v921
    %v935 = vunpack.c.l.s4 1983009808
    %v936 = vunpack.c.0.s8 %v935
    %v937 = vlaneseq
    %v938 = vshrl.u32 %v937, 7
    %v939 = vsub.s32 %v936, %v938
    %v940 = vrot.slane %v932, %v939
    %v942 = vunpack.c.l.s4 1983009808
    %v943 = vunpack.c.0.s8 %v942
    %v944 = vlaneseq
    %v945 = vshrl.u32 %v944, 7
    %v946 = vsub.s32 %v943, %v945
    %v947 = vrot.slane %v933, %v946
    %v948 = vcombine.low %v915, %v927
    %v949 = vcombine.high %v915, %v927
    %v951 = vunpack.c.l.s4 1983009808
    %v952 = vunpack.c.0.s8 %v951
    %v953 = vlaneseq
    %v954 = vshrl.u32 %v953, 7
    %v955 = vsub.s32 %v952, %v954
    %v956 = vrot.slane %v948, %v955
    %v958 = vunpack.c.l.s4 1983009808
    %v959 = vunpack.c.0.s8 %v958
    %v960 = vlaneseq
    %v961 = vshrl.u32 %v960, 7
    %v962 = vsub.s32 %v959, %v961
    %v963 = vrot.slane %v949, %v962
    %v964 = vcombine.low %v940, %v956
    %v965 = vcombine.high %v940, %v956
    %v967 = vunpack.c.l.s4 1934713408
    %v968 = vunpack.c.0.s8 %v967
    %v969 = vlaneseq
    %v970 = vshrl.u32 %v969, 7
    %v971 = vsub.s32 %v968, %v970
    %v972 = vrot.slane %v964, %v971
    %v974 = vunpack.c.l.s4 1934713408
    %v975 = vunpack.c.0.s8 %v974
    %v976 = vlaneseq
    %v977 = vshrl.u32 %v976, 7
    %v978 = vsub.s32 %v975, %v977
    %v979 = vrot.slane %v965, %v978
    %v980 = vcombine.low %v947, %v963
    %v981 = vcombine.high %v947, %v963
    %v983 = vunpack.c.l.s4 1934713408
    %v984 = vunpack.c.0.s8 %v983
    %v985 = vlaneseq
    %v986 = vshrl.u32 %v985, 7
    %v987 = vsub.s32 %v984, %v986
    %v988 = vrot.slane %v980, %v987
    %v990 = vunpack.c.l.s4 1934713408
    %v991 = vunpack.c.0.s8 %v990
    %v992 = vlaneseq
    %v993 = vshrl.u32 %v992, 7
    %v994 = vsub.s32 %v991, %v993
    %v995 = vrot.slane %v981, %v994
    %v996 = vcombine.high %v972, 0.0
    %v997 = vcombine.high %v979, 0.0
    %v998 = vcombine.high %v988, 0.0
    %v999 = vcombine.high %v995, 0.0
    %v1000 = vcombine.low %v325, %v923
    %v1001 = vcombine.high %v325, %v923
    %v1003 = vunpack.c.l.s4 1983009808
    %v1004 = vunpack.c.0.s8 %v1003
    %v1005 = vlaneseq
    %v1006 = vshrl.u32 %v1005, 7
    %v1007 = vsub.s32 %v1004, %v1006
    %v1008 = vrot.slane %v1000, %v1007
    %v1010 = vunpack.c.l.s4 1983009808
    %v1011 = vunpack.c.0.s8 %v1010
    %v1012 = vlaneseq
    %v1013 = vshrl.u32 %v1012, 7
    %v1014 = vsub.s32 %v1011, %v1013
    %v1015 = vrot.slane %v1001, %v1014
    %v1016 = vcombine.low %v917, %v929
    %v1017 = vcombine.high %v917, %v929
    %v1019 = vunpack.c.l.s4 1983009808
    %v1020 = vunpack.c.0.s8 %v1019
    %v1021 = vlaneseq
    %v1022 = vshrl.u32 %v1021, 7
    %v1023 = vsub.s32 %v1020, %v1022
    %v1024 = vrot.slane %v1016, %v1023
    %v1026 = vunpack.c.l.s4 1983009808
    %v1027 = vunpack.c.0.s8 %v1026
    %v1028 = vlaneseq
    %v1029 = vshrl.u32 %v1028, 7
    %v1030 = vsub.s32 %v1027, %v1029
    %v1031 = vrot.slane %v1017, %v1030
    %v1032 = vcombine.low %v1008, %v1024
    %v1033 = vcombine.high %v1008, %v1024
    %v1035 = vunpack.c.l.s4 1934713408
    %v1036 = vunpack.c.0.s8 %v1035
    %v1037 = vlaneseq
    %v1038 = vshrl.u32 %v1037, 7
    %v1039 = vsub.s32 %v1036, %v1038
    %v1040 = vrot.slane %v1032, %v1039
    %v1042 = vunpack.c.l.s4 1934713408
    %v1043 = vunpack.c.0.s8 %v1042
    %v1044 = vlaneseq
    %v1045 = vshrl.u32 %v1044, 7
    %v1046 = vsub.s32 %v1043, %v1045
    %v1047 = vrot.slane %v1033, %v1046
    %v1048 = vcombine.low %v1015, %v1031
    %v1049 = vcombine.high %v1015, %v1031
    %v1051 = vunpack.c.l.s4 1934713408
    %v1052 = vunpack.c.0.s8 %v1051
    %v1053 = vlaneseq
    %v1054 = vshrl.u32 %v1053, 7
    %v1055 = vsub.s32 %v1052, %v1054
    %v1056 = vrot.slane %v1048, %v1055
    %v1058 = vunpack.c.l.s4 1934713408
    %v1059 = vunpack.c.0.s8 %v1058
    %v1060 = vlaneseq
    %v1061 = vshrl.u32 %v1060, 7
    %v1062 = vsub.s32 %v1059, %v1061
    %v1063 = vrot.slane %v1049, %v1062
    %v1064 = vcombine.high %v1040, 0.0
    %v1065 = vcombine.high %v1047, 0.0
    %v1066 = vcombine.high %v1056, 0.0
    %v1067 = vcombine.high %v1063, 0.0
    %v1068 = vcombine.low %v972, %v979
    %v1070 = vunpack.c.l.s4 1983009808
    %v1071 = vunpack.c.0.s8 %v1070
    %v1072 = vlaneseq
    %v1073 = vshrl.u32 %v1072, 7
    %v1074 = vsub.s32 %v1071, %v1073
    %v1075 = vrot.slane %v1068, %v1074
    %v1076 = vcombine.low %v996, %v997
    %v1078 = vunpack.c.l.s4 1983009808
    %v1079 = vunpack.c.0.s8 %v1078
    %v1080 = vlaneseq
    %v1081 = vshrl.u32 %v1080, 7
    %v1082 = vsub.s32 %v1079, %v1081
    %v1083 = vrot.slane %v1076, %v1082
    %v1084 = vcombine.low %v988, %v995
    %v1086 = vunpack.c.l.s4 1983009808
    %v1087 = vunpack.c.0.s8 %v1086
    %v1088 = vlaneseq
    %v1089 = vshrl.u32 %v1088, 7
    %v1090 = vsub.s32 %v1087, %v1089
    %v1091 = vrot.slane %v1084, %v1090
    %v1092 = vcombine.low %v998, %v999
    %v1094 = vunpack.c.l.s4 1983009808
    %v1095 = vunpack.c.0.s8 %v1094
    %v1096 = vlaneseq
    %v1097 = vshrl.u32 %v1096, 7
    %v1098 = vsub.s32 %v1095, %v1097
    %v1099 = vrot.slane %v1092, %v1098
    %v1100 = vcombine.low %v1075, %v1083
    %v1101 = vcombine.high %v1075, %v1083
    %v1103 = vunpack.c.l.s4 1934713408
    %v1104 = vunpack.c.0.s8 %v1103
    %v1105 = vlaneseq
    %v1106 = vshrl.u32 %v1105, 7
    %v1107 = vsub.s32 %v1104, %v1106
    %v1108 = vrot.slane %v1100, %v1107
    %v1110 = vunpack.c.l.s4 1934713408
    %v1111 = vunpack.c.0.s8 %v1110
    %v1112 = vlaneseq
    %v1113 = vshrl.u32 %v1112, 7
    %v1114 = vsub.s32 %v1111, %v1113
    %v1115 = vrot.slane %v1101, %v1114
    %v1116 = vcombine.low %v1091, %v1099
    %v1117 = vcombine.high %v1091, %v1099
    %v1119 = vunpack.c.l.s4 1934713408
    %v1120 = vunpack.c.0.s8 %v1119
    %v1121 = vlaneseq
    %v1122 = vshrl.u32 %v1121, 7
    %v1123 = vsub.s32 %v1120, %v1122
    %v1124 = vrot.slane %v1116, %v1123
    %v1126 = vunpack.c.l.s4 1934713408
    %v1127 = vunpack.c.0.s8 %v1126
    %v1128 = vlaneseq
    %v1129 = vshrl.u32 %v1128, 7
    %v1130 = vsub.s32 %v1127, %v1129
    %v1131 = vrot.slane %v1117, %v1130
    %v1132 = vcombine.low %v1108, %v1124
    %v1133 = vcombine.high %v1108, %v1124
    %v1134 = vcombine.low %v1115, %v1131
    %v1135 = vcombine.high %v1115, %v1131
    %v1136 = vcombine.low %v1040, %v1047
    %v1138 = vunpack.c.l.s4 1983009808
    %v1139 = vunpack.c.0.s8 %v1138
    %v1140 = vlaneseq
    %v1141 = vshrl.u32 %v1140, 7
    %v1142 = vsub.s32 %v1139, %v1141
    %v1143 = vrot.slane %v1136, %v1142
    %v1144 = vcombine.low %v1064, %v1065
    %v1146 = vunpack.c.l.s4 1983009808
    %v1147 = vunpack.c.0.s8 %v1146
    %v1148 = vlaneseq
    %v1149 = vshrl.u32 %v1148, 7
    %v1150 = vsub.s32 %v1147, %v1149
    %v1151 = vrot.slane %v1144, %v1150
    %v1152 = vcombine.low %v1056, %v1063
    %v1154 = vunpack.c.l.s4 1983009808
    %v1155 = vunpack.c.0.s8 %v1154
    %v1156 = vlaneseq
    %v1157 = vshrl.u32 %v1156, 7
    %v1158 = vsub.s32 %v1155, %v1157
    %v1159 = vrot.slane %v1152, %v1158
    %v1160 = vcombine.low %v1066, %v1067
    %v1162 = vunpack.c.l.s4 1983009808
    %v1163 = vunpack.c.0.s8 %v1162
    %v1164 = vlaneseq
    %v1165 = vshrl.u32 %v1164, 7
    %v1166 = vsub.s32 %v1163, %v1165
    %v1167 = vrot.slane %v1160, %v1166
    %v1168 = vcombine.low %v1143, %v1151
    %v1169 = vcombine.high %v1143, %v1151
    %v1171 = vunpack.c.l.s4 1934713408
    %v1172 = vunpack.c.0.s8 %v1171
    %v1173 = vlaneseq
    %v1174 = vshrl.u32 %v1173, 7
    %v1175 = vsub.s32 %v1172, %v1174
    %v1176 = vrot.slane %v1168, %v1175
    %v1178 = vunpack.c.l.s4 1934713408
    %v1179 = vunpack.c.0.s8 %v1178
    %v1180 = vlaneseq
    %v1181 = vshrl.u32 %v1180, 7
    %v1182 = vsub.s32 %v1179, %v1181
    %v1183 = vrot.slane %v1169, %v1182
    %v1184 = vcombine.low %v1159, %v1167
    %v1185 = vcombine.high %v1159, %v1167
    %v1187 = vunpack.c.l.s4 1934713408
    %v1188 = vunpack.c.0.s8 %v1187
    %v1189 = vlaneseq
    %v1190 = vshrl.u32 %v1189, 7
    %v1191 = vsub.s32 %v1188, %v1190
    %v1192 = vrot.slane %v1184, %v1191
    %v1194 = vunpack.c.l.s4 1934713408
    %v1195 = vunpack.c.0.s8 %v1194
    %v1196 = vlaneseq
    %v1197 = vshrl.u32 %v1196, 7
    %v1198 = vsub.s32 %v1195, %v1197
    %v1199 = vrot.slane %v1185, %v1198
    %v1200 = vcombine.low %v1176, %v1192
    %v1201 = vcombine.high %v1176, %v1192
    %v1202 = vcombine.low %v1183, %v1199
    %v1203 = vcombine.high %v1183, %v1199
    %vm1204 = vcmask 64512
    %v1206 = vsel %vm1204, %v548, 0
    %v1209 = vsel %vm1204, %v840, 0
    %1211 = vmatprep.subr.mxu0 0.0
    %1212 = vmatpush1.xpose.msra.mxu0 %v1209
    %1213 = vmatprep.subr.mxu0 0.0
    %1214 = vmatpush1.xpose.msra.mxu0 0.0
    %1215 = vmatprep.subr.mxu0 0.0
    %1216 = vmatpush1.xpose.msra.mxu0 0.0
    %1217 = vmatprep.subr.mxu0 0.0
    %1218 = vmatpush1.xpose.msra.mxu0 0.0
    %1219 = vmatprep.subr.mxu0 0.0
    %1220 = vmatpush1.xpose.msra.mxu0 0.0
    %1221 = vmatprep.subr.mxu0 0.0
    %1222 = vmatpush1.xpose.msra.mxu0 0.0
    %1223 = vmatprep.subr.mxu0 0.0
    %1224 = vmatpush1.xpose.msra.mxu0 0.0
    %1225 = vmatprep.subr.mxu0 0.0
    %1226 = vmatpush1.xpose.msra.mxu0 0.0
    %1227 = vmatprep.subr.mxu0 0.0
    %1228 = vmatpush1.xpose.msra.mxu0 0.0
    %1229 = vmatprep.subr.mxu0 0.0
    %1230 = vmatpush1.xpose.msra.mxu0 0.0
    %1231 = vmatprep.subr.mxu0 0.0
    %1232 = vmatpush1.xpose.msra.mxu0 0.0
    %1233 = vmatprep.subr.mxu0 0.0
    %1234 = vmatpush1.xpose.msra.mxu0 0.0
    %1235 = vmatprep.subr.mxu0 0.0
    %1236 = vmatpush1.xpose.msra.mxu0 0.0
    %1237 = vmatprep.subr.mxu0 0.0
    %1238 = vmatpush1.xpose.msra.mxu0 0.0
    %1239 = vmatprep.subr.mxu0 0.0
    %1240 = vmatpush1.xpose.msra.mxu0 0.0
    %1241 = vmatprep.subr.mxu0 0.0
    %1242 = vmatpush1.xpose.msra.mxu0 0.0
    %1243 = vmatprep.subr.mxu0 0.0
    %1244 = vmatpush1.xpose.msra.mxu0 0.0
    %1245 = vmatprep.subr.mxu0 0.0
    %1246 = vmatpush1.xpose.msra.mxu0 0.0
    %1247 = vmatprep.subr.mxu0 0.0
    %1248 = vmatpush1.xpose.msra.mxu0 0.0
    %1249 = vmatprep.subr.mxu0 0.0
    %1250 = vmatpush1.xpose.msra.mxu0 0.0
    %1251 = vmatprep.subr.mxu0 0.0
    %1252 = vmatpush1.xpose.msra.mxu0 0.0
    %1253 = vmatprep.subr.mxu0 0.0
    %1254 = vmatpush1.xpose.msra.mxu0 0.0
    %1255 = vmatprep.subr.mxu0 0.0
    %1256 = vmatpush1.xpose.msra.mxu0 0.0
    %1257 = vmatprep.subr.mxu0 0.0
    %1258 = vmatpush1.xpose.msra.mxu0 0.0
    %1259 = vmatprep.subr.mxu0 0.0
    %1260 = vmatpush1.xpose.msra.mxu0 0.0
    %1261 = vmatprep.subr.mxu0 0.0
    %1262 = vmatpush1.xpose.msra.mxu0 0.0
    %1263 = vmatprep.subr.mxu0 0.0
    %1264 = vmatpush1.xpose.msra.mxu0 0.0
    %1265 = vmatprep.subr.mxu0 0.0
    %1266 = vmatpush1.xpose.msra.mxu0 0.0
    %1267 = vmatprep.subr.mxu0 0.0
    %1268 = vmatpush1.xpose.msra.mxu0 0.0
    %1269 = vmatprep.subr.mxu0 0.0
    %1270 = vmatpush1.xpose.msra.mxu0 0.0
    %1271 = vmatprep.subr.mxu0 0.0
    %1272 = vmatpush1.xpose.msra.mxu0 0.0
    %1273 = vmatprep.subr.mxu0 0.0
    %1274 = vmatpush1.xpose.msra.mxu0 0.0
    %1275 = vmatprep.mubr.f32.mxu0 0.0
    %1276 = vmatmul.mubr.f32.gmra.mrb[0].mxu0 %v1206
    %v1277 = vpop.f32.mrb[0].mxu0
    %v1278 = vadd.f32 0.0, %v1277
    %v1279 = vpop.f32.mrb[0].mxu0
    %1280 = vdwg.mxu0
    %v1282 = vsel %vm1204, %v549, 0
    %v1285 = vsel %vm1204, %v841, 0
    %1287 = vmatprep.subr.mxu0 0.0
    %1288 = vmatpush1.xpose.msra.mxu0 %v1285
    %1289 = vmatprep.subr.mxu0 0.0
    %1290 = vmatpush1.xpose.msra.mxu0 0.0
    %1291 = vmatprep.subr.mxu0 0.0
    %1292 = vmatpush1.xpose.msra.mxu0 0.0
    %1293 = vmatprep.subr.mxu0 0.0
    %1294 = vmatpush1.xpose.msra.mxu0 0.0
    %1295 = vmatprep.subr.mxu0 0.0
    %1296 = vmatpush1.xpose.msra.mxu0 0.0
    %1297 = vmatprep.subr.mxu0 0.0
    %1298 = vmatpush1.xpose.msra.mxu0 0.0
    %1299 = vmatprep.subr.mxu0 0.0
    %1300 = vmatpush1.xpose.msra.mxu0 0.0
    %1301 = vmatprep.subr.mxu0 0.0
    %1302 = vmatpush1.xpose.msra.mxu0 0.0
    %1303 = vmatprep.subr.mxu0 0.0
    %1304 = vmatpush1.xpose.msra.mxu0 0.0
    %1305 = vmatprep.subr.mxu0 0.0
    %1306 = vmatpush1.xpose.msra.mxu0 0.0
    %1307 = vmatprep.subr.mxu0 0.0
    %1308 = vmatpush1.xpose.msra.mxu0 0.0
    %1309 = vmatprep.subr.mxu0 0.0
    %1310 = vmatpush1.xpose.msra.mxu0 0.0
    %1311 = vmatprep.subr.mxu0 0.0
    %1312 = vmatpush1.xpose.msra.mxu0 0.0
    %1313 = vmatprep.subr.mxu0 0.0
    %1314 = vmatpush1.xpose.msra.mxu0 0.0
    %1315 = vmatprep.subr.mxu0 0.0
    %1316 = vmatpush1.xpose.msra.mxu0 0.0
    %1317 = vmatprep.subr.mxu0 0.0
    %1318 = vmatpush1.xpose.msra.mxu0 0.0
    %1319 = vmatprep.subr.mxu0 0.0
    %1320 = vmatpush1.xpose.msra.mxu0 0.0
    %1321 = vmatprep.subr.mxu0 0.0
    %1322 = vmatpush1.xpose.msra.mxu0 0.0
    %1323 = vmatprep.subr.mxu0 0.0
    %1324 = vmatpush1.xpose.msra.mxu0 0.0
    %1325 = vmatprep.subr.mxu0 0.0
    %1326 = vmatpush1.xpose.msra.mxu0 0.0
    %1327 = vmatprep.subr.mxu0 0.0
    %1328 = vmatpush1.xpose.msra.mxu0 0.0
    %1329 = vmatprep.subr.mxu0 0.0
    %1330 = vmatpush1.xpose.msra.mxu0 0.0
    %1331 = vmatprep.subr.mxu0 0.0
    %1332 = vmatpush1.xpose.msra.mxu0 0.0
    %1333 = vmatprep.subr.mxu0 0.0
    %1334 = vmatpush1.xpose.msra.mxu0 0.0
    %1335 = vmatprep.subr.mxu0 0.0
    %1336 = vmatpush1.xpose.msra.mxu0 0.0
    %1337 = vmatprep.subr.mxu0 0.0
    %1338 = vmatpush1.xpose.msra.mxu0 0.0
    %1339 = vmatprep.subr.mxu0 0.0
    %1340 = vmatpush1.xpose.msra.mxu0 0.0
    %1341 = vmatprep.subr.mxu0 0.0
    %1342 = vmatpush1.xpose.msra.mxu0 0.0
    %1343 = vmatprep.subr.mxu0 0.0
    %1344 = vmatpush1.xpose.msra.mxu0 0.0
    %1345 = vmatprep.subr.mxu0 0.0
    %1346 = vmatpush1.xpose.msra.mxu0 0.0
    %1347 = vmatprep.subr.mxu0 0.0
    %1348 = vmatpush1.xpose.msra.mxu0 0.0
    %1349 = vmatprep.subr.mxu0 0.0
    %1350 = vmatpush1.xpose.msra.mxu0 0.0
    %1351 = vmatprep.mubr.f32.mxu0 0.0
    %1352 = vmatmul.mubr.f32.gmra.mrb[0].mxu0 %v1282
    %v1353 = vpop.f32.mrb[0].mxu0
    %v1354 = vadd.f32 0.0, %v1353
    %v1355 = vpop.f32.mrb[0].mxu0
    %1356 = vdwg.mxu0
    %v1358 = vsel %vm1204, %v550, 0
    %v1361 = vsel %vm1204, %v842, 0
    %1363 = vmatprep.subr.mxu0 0.0
    %1364 = vmatpush1.xpose.msra.mxu0 %v1361
    %1365 = vmatprep.subr.mxu0 0.0
    %1366 = vmatpush1.xpose.msra.mxu0 0.0
    %1367 = vmatprep.subr.mxu0 0.0
    %1368 = vmatpush1.xpose.msra.mxu0 0.0
    %1369 = vmatprep.subr.mxu0 0.0
    %1370 = vmatpush1.xpose.msra.mxu0 0.0
    %1371 = vmatprep.subr.mxu0 0.0
    %1372 = vmatpush1.xpose.msra.mxu0 0.0
    %1373 = vmatprep.subr.mxu0 0.0
    %1374 = vmatpush1.xpose.msra.mxu0 0.0
    %1375 = vmatprep.subr.mxu0 0.0
    %1376 = vmatpush1.xpose.msra.mxu0 0.0
    %1377 = vmatprep.subr.mxu0 0.0
    %1378 = vmatpush1.xpose.msra.mxu0 0.0
    %1379 = vmatprep.subr.mxu0 0.0
    %1380 = vmatpush1.xpose.msra.mxu0 0.0
    %1381 = vmatprep.subr.mxu0 0.0
    %1382 = vmatpush1.xpose.msra.mxu0 0.0
    %1383 = vmatprep.subr.mxu0 0.0
    %1384 = vmatpush1.xpose.msra.mxu0 0.0
    %1385 = vmatprep.subr.mxu0 0.0
    %1386 = vmatpush1.xpose.msra.mxu0 0.0
    %1387 = vmatprep.subr.mxu0 0.0
    %1388 = vmatpush1.xpose.msra.mxu0 0.0
    %1389 = vmatprep.subr.mxu0 0.0
    %1390 = vmatpush1.xpose.msra.mxu0 0.0
    %1391 = vmatprep.subr.mxu0 0.0
    %1392 = vmatpush1.xpose.msra.mxu0 0.0
    %1393 = vmatprep.subr.mxu0 0.0
    %1394 = vmatpush1.xpose.msra.mxu0 0.0
    %1395 = vmatprep.subr.mxu0 0.0
    %1396 = vmatpush1.xpose.msra.mxu0 0.0
    %1397 = vmatprep.subr.mxu0 0.0
    %1398 = vmatpush1.xpose.msra.mxu0 0.0
    %1399 = vmatprep.subr.mxu0 0.0
    %1400 = vmatpush1.xpose.msra.mxu0 0.0
    %1401 = vmatprep.subr.mxu0 0.0
    %1402 = vmatpush1.xpose.msra.mxu0 0.0
    %1403 = vmatprep.subr.mxu0 0.0
    %1404 = vmatpush1.xpose.msra.mxu0 0.0
    %1405 = vmatprep.subr.mxu0 0.0
    %1406 = vmatpush1.xpose.msra.mxu0 0.0
    %1407 = vmatprep.subr.mxu0 0.0
    %1408 = vmatpush1.xpose.msra.mxu0 0.0
    %1409 = vmatprep.subr.mxu0 0.0
    %1410 = vmatpush1.xpose.msra.mxu0 0.0
    %1411 = vmatprep.subr.mxu0 0.0
    %1412 = vmatpush1.xpose.msra.mxu0 0.0
    %1413 = vmatprep.subr.mxu0 0.0
    %1414 = vmatpush1.xpose.msra.mxu0 0.0
    %1415 = vmatprep.subr.mxu0 0.0
    %1416 = vmatpush1.xpose.msra.mxu0 0.0
    %1417 = vmatprep.subr.mxu0 0.0
    %1418 = vmatpush1.xpose.msra.mxu0 0.0
    %1419 = vmatprep.subr.mxu0 0.0
    %1420 = vmatpush1.xpose.msra.mxu0 0.0
    %1421 = vmatprep.subr.mxu0 0.0
    %1422 = vmatpush1.xpose.msra.mxu0 0.0
    %1423 = vmatprep.subr.mxu0 0.0
    %1424 = vmatpush1.xpose.msra.mxu0 0.0
    %1425 = vmatprep.subr.mxu0 0.0
    %1426 = vmatpush1.xpose.msra.mxu0 0.0
    %1427 = vmatprep.mubr.f32.mxu0 0.0
    %1428 = vmatmul.mubr.f32.gmra.mrb[0].mxu0 %v1358
    %v1429 = vpop.f32.mrb[0].mxu0
    %v1430 = vadd.f32 0.0, %v1429
    %v1431 = vpop.f32.mrb[0].mxu0
    %1432 = vdwg.mxu0
    %v1434 = vsel %vm1204, %v551, 0
    %v1437 = vsel %vm1204, %v843, 0
    %1439 = vmatprep.subr.mxu0 0.0
    %1440 = vmatpush1.xpose.msra.mxu0 %v1437
    %1441 = vmatprep.subr.mxu0 0.0
    %1442 = vmatpush1.xpose.msra.mxu0 0.0
    %1443 = vmatprep.subr.mxu0 0.0
    %1444 = vmatpush1.xpose.msra.mxu0 0.0
    %1445 = vmatprep.subr.mxu0 0.0
    %1446 = vmatpush1.xpose.msra.mxu0 0.0
    %1447 = vmatprep.subr.mxu0 0.0
    %1448 = vmatpush1.xpose.msra.mxu0 0.0
    %1449 = vmatprep.subr.mxu0 0.0
    %1450 = vmatpush1.xpose.msra.mxu0 0.0
    %1451 = vmatprep.subr.mxu0 0.0
    %1452 = vmatpush1.xpose.msra.mxu0 0.0
    %1453 = vmatprep.subr.mxu0 0.0
    %1454 = vmatpush1.xpose.msra.mxu0 0.0
    %1455 = vmatprep.subr.mxu0 0.0
    %1456 = vmatpush1.xpose.msra.mxu0 0.0
    %1457 = vmatprep.subr.mxu0 0.0
    %1458 = vmatpush1.xpose.msra.mxu0 0.0
    %1459 = vmatprep.subr.mxu0 0.0
    %1460 = vmatpush1.xpose.msra.mxu0 0.0
    %1461 = vmatprep.subr.mxu0 0.0
    %1462 = vmatpush1.xpose.msra.mxu0 0.0
    %1463 = vmatprep.subr.mxu0 0.0
    %1464 = vmatpush1.xpose.msra.mxu0 0.0
    %1465 = vmatprep.subr.mxu0 0.0
    %1466 = vmatpush1.xpose.msra.mxu0 0.0
    %1467 = vmatprep.subr.mxu0 0.0
    %1468 = vmatpush1.xpose.msra.mxu0 0.0
    %1469 = vmatprep.subr.mxu0 0.0
    %1470 = vmatpush1.xpose.msra.mxu0 0.0
    %1471 = vmatprep.subr.mxu0 0.0
    %1472 = vmatpush1.xpose.msra.mxu0 0.0
    %1473 = vmatprep.subr.mxu0 0.0
    %1474 = vmatpush1.xpose.msra.mxu0 0.0
    %1475 = vmatprep.subr.mxu0 0.0
    %1476 = vmatpush1.xpose.msra.mxu0 0.0
    %1477 = vmatprep.subr.mxu0 0.0
    %1478 = vmatpush1.xpose.msra.mxu0 0.0
    %1479 = vmatprep.subr.mxu0 0.0
    %1480 = vmatpush1.xpose.msra.mxu0 0.0
    %1481 = vmatprep.subr.mxu0 0.0
    %1482 = vmatpush1.xpose.msra.mxu0 0.0
    %1483 = vmatprep.subr.mxu0 0.0
    %1484 = vmatpush1.xpose.msra.mxu0 0.0
    %1485 = vmatprep.subr.mxu0 0.0
    %1486 = vmatpush1.xpose.msra.mxu0 0.0
    %1487 = vmatprep.subr.mxu0 0.0
    %1488 = vmatpush1.xpose.msra.mxu0 0.0
    %1489 = vmatprep.subr.mxu0 0.0
    %1490 = vmatpush1.xpose.msra.mxu0 0.0
    %1491 = vmatprep.subr.mxu0 0.0
    %1492 = vmatpush1.xpose.msra.mxu0 0.0
    %1493 = vmatprep.subr.mxu0 0.0
    %1494 = vmatpush1.xpose.msra.mxu0 0.0
    %1495 = vmatprep.subr.mxu0 0.0
    %1496 = vmatpush1.xpose.msra.mxu0 0.0
    %1497 = vmatprep.subr.mxu0 0.0
    %1498 = vmatpush1.xpose.msra.mxu0 0.0
    %1499 = vmatprep.subr.mxu0 0.0
    %1500 = vmatpush1.xpose.msra.mxu0 0.0
    %1501 = vmatprep.subr.mxu0 0.0
    %1502 = vmatpush1.xpose.msra.mxu0 0.0
    %1503 = vmatprep.mubr.f32.mxu0 0.0
    %1504 = vmatmul.mubr.f32.gmra.mrb[0].mxu0 %v1434
    %v1505 = vpop.f32.mrb[0].mxu0
    %v1506 = vadd.f32 0.0, %v1505
    %v1507 = vpop.f32.mrb[0].mxu0
    %1508 = vdwg.mxu0
    %v1510 = vsel %vm1204, %v616, 0
    %v1513 = vsel %vm1204, %v908, 0
    %1515 = vmatprep.subr.mxu0 0.0
    %1516 = vmatpush1.xpose.msra.mxu0 %v1513
    %1517 = vmatprep.subr.mxu0 0.0
    %1518 = vmatpush1.xpose.msra.mxu0 0.0
    %1519 = vmatprep.subr.mxu0 0.0
    %1520 = vmatpush1.xpose.msra.mxu0 0.0
    %1521 = vmatprep.subr.mxu0 0.0
    %1522 = vmatpush1.xpose.msra.mxu0 0.0
    %1523 = vmatprep.subr.mxu0 0.0
    %1524 = vmatpush1.xpose.msra.mxu0 0.0
    %1525 = vmatprep.subr.mxu0 0.0
    %1526 = vmatpush1.xpose.msra.mxu0 0.0
    %1527 = vmatprep.subr.mxu0 0.0
    %1528 = vmatpush1.xpose.msra.mxu0 0.0
    %1529 = vmatprep.subr.mxu0 0.0
    %1530 = vmatpush1.xpose.msra.mxu0 0.0
    %1531 = vmatprep.subr.mxu0 0.0
    %1532 = vmatpush1.xpose.msra.mxu0 0.0
    %1533 = vmatprep.subr.mxu0 0.0
    %1534 = vmatpush1.xpose.msra.mxu0 0.0
    %1535 = vmatprep.subr.mxu0 0.0
    %1536 = vmatpush1.xpose.msra.mxu0 0.0
    %1537 = vmatprep.subr.mxu0 0.0
    %1538 = vmatpush1.xpose.msra.mxu0 0.0
    %1539 = vmatprep.subr.mxu0 0.0
    %1540 = vmatpush1.xpose.msra.mxu0 0.0
    %1541 = vmatprep.subr.mxu0 0.0
    %1542 = vmatpush1.xpose.msra.mxu0 0.0
    %1543 = vmatprep.subr.mxu0 0.0
    %1544 = vmatpush1.xpose.msra.mxu0 0.0
    %1545 = vmatprep.subr.mxu0 0.0
    %1546 = vmatpush1.xpose.msra.mxu0 0.0
    %1547 = vmatprep.subr.mxu0 0.0
    %1548 = vmatpush1.xpose.msra.mxu0 0.0
    %1549 = vmatprep.subr.mxu0 0.0
    %1550 = vmatpush1.xpose.msra.mxu0 0.0
    %1551 = vmatprep.subr.mxu0 0.0
    %1552 = vmatpush1.xpose.msra.mxu0 0.0
    %1553 = vmatprep.subr.mxu0 0.0
    %1554 = vmatpush1.xpose.msra.mxu0 0.0
    %1555 = vmatprep.subr.mxu0 0.0
    %1556 = vmatpush1.xpose.msra.mxu0 0.0
    %1557 = vmatprep.subr.mxu0 0.0
    %1558 = vmatpush1.xpose.msra.mxu0 0.0
    %1559 = vmatprep.subr.mxu0 0.0
    %1560 = vmatpush1.xpose.msra.mxu0 0.0
    %1561 = vmatprep.subr.mxu0 0.0
    %1562 = vmatpush1.xpose.msra.mxu0 0.0
    %1563 = vmatprep.subr.mxu0 0.0
    %1564 = vmatpush1.xpose.msra.mxu0 0.0
    %1565 = vmatprep.subr.mxu0 0.0
    %1566 = vmatpush1.xpose.msra.mxu0 0.0
    %1567 = vmatprep.subr.mxu0 0.0
    %1568 = vmatpush1.xpose.msra.mxu0 0.0
    %1569 = vmatprep.subr.mxu0 0.0
    %1570 = vmatpush1.xpose.msra.mxu0 0.0
    %1571 = vmatprep.subr.mxu0 0.0
    %1572 = vmatpush1.xpose.msra.mxu0 0.0
    %1573 = vmatprep.subr.mxu0 0.0
    %1574 = vmatpush1.xpose.msra.mxu0 0.0
    %1575 = vmatprep.subr.mxu0 0.0
    %1576 = vmatpush1.xpose.msra.mxu0 0.0
    %1577 = vmatprep.subr.mxu0 0.0
    %1578 = vmatpush1.xpose.msra.mxu0 0.0
    %1579 = vmatprep.mubr.f32.mxu0 0.0
    %1580 = vmatmul.mubr.f32.gmra.mrb[0].mxu0 %v1510
    %v1581 = vpop.f32.mrb[0].mxu0
    %v1582 = vadd.f32 0.0, %v1581
    %v1583 = vpop.f32.mrb[0].mxu0
    %1584 = vdwg.mxu0
    %v1586 = vsel %vm1204, %v617, 0
    %v1589 = vsel %vm1204, %v909, 0
    %1591 = vmatprep.subr.mxu0 0.0
    %1592 = vmatpush1.xpose.msra.mxu0 %v1589
    %1593 = vmatprep.subr.mxu0 0.0
    %1594 = vmatpush1.xpose.msra.mxu0 0.0
    %1595 = vmatprep.subr.mxu0 0.0
    %1596 = vmatpush1.xpose.msra.mxu0 0.0
    %1597 = vmatprep.subr.mxu0 0.0
    %1598 = vmatpush1.xpose.msra.mxu0 0.0
    %1599 = vmatprep.subr.mxu0 0.0
    %1600 = vmatpush1.xpose.msra.mxu0 0.0
    %1601 = vmatprep.subr.mxu0 0.0
    %1602 = vmatpush1.xpose.msra.mxu0 0.0
    %1603 = vmatprep.subr.mxu0 0.0
    %1604 = vmatpush1.xpose.msra.mxu0 0.0
    %1605 = vmatprep.subr.mxu0 0.0
    %1606 = vmatpush1.xpose.msra.mxu0 0.0
    %1607 = vmatprep.subr.mxu0 0.0
    %1608 = vmatpush1.xpose.msra.mxu0 0.0
    %1609 = vmatprep.subr.mxu0 0.0
    %1610 = vmatpush1.xpose.msra.mxu0 0.0
    %1611 = vmatprep.subr.mxu0 0.0
    %1612 = vmatpush1.xpose.msra.mxu0 0.0
    %1613 = vmatprep.subr.mxu0 0.0
    %1614 = vmatpush1.xpose.msra.mxu0 0.0
    %1615 = vmatprep.subr.mxu0 0.0
    %1616 = vmatpush1.xpose.msra.mxu0 0.0
    %1617 = vmatprep.subr.mxu0 0.0
    %1618 = vmatpush1.xpose.msra.mxu0 0.0
    %1619 = vmatprep.subr.mxu0 0.0
    %1620 = vmatpush1.xpose.msra.mxu0 0.0
    %1621 = vmatprep.subr.mxu0 0.0
    %1622 = vmatpush1.xpose.msra.mxu0 0.0
    %1623 = vmatprep.subr.mxu0 0.0
    %1624 = vmatpush1.xpose.msra.mxu0 0.0
    %1625 = vmatprep.subr.mxu0 0.0
    %1626 = vmatpush1.xpose.msra.mxu0 0.0
    %1627 = vmatprep.subr.mxu0 0.0
    %1628 = vmatpush1.xpose.msra.mxu0 0.0
    %1629 = vmatprep.subr.mxu0 0.0
    %1630 = vmatpush1.xpose.msra.mxu0 0.0
    %1631 = vmatprep.subr.mxu0 0.0
    %1632 = vmatpush1.xpose.msra.mxu0 0.0
    %1633 = vmatprep.subr.mxu0 0.0
    %1634 = vmatpush1.xpose.msra.mxu0 0.0
    %1635 = vmatprep.subr.mxu0 0.0
    %1636 = vmatpush1.xpose.msra.mxu0 0.0
    %1637 = vmatprep.subr.mxu0 0.0
    %1638 = vmatpush1.xpose.msra.mxu0 0.0
    %1639 = vmatprep.subr.mxu0 0.0
    %1640 = vmatpush1.xpose.msra.mxu0 0.0
    %1641 = vmatprep.subr.mxu0 0.0
    %1642 = vmatpush1.xpose.msra.mxu0 0.0
    %1643 = vmatprep.subr.mxu0 0.0
    %1644 = vmatpush1.xpose.msra.mxu0 0.0
    %1645 = vmatprep.subr.mxu0 0.0
    %1646 = vmatpush1.xpose.msra.mxu0 0.0
    %1647 = vmatprep.subr.mxu0 0.0
    %1648 = vmatpush1.xpose.msra.mxu0 0.0
    %1649 = vmatprep.subr.mxu0 0.0
    %1650 = vmatpush1.xpose.msra.mxu0 0.0
    %1651 = vmatprep.subr.mxu0 0.0
    %1652 = vmatpush1.xpose.msra.mxu0 0.0
    %1653 = vmatprep.subr.mxu0 0.0
    %1654 = vmatpush1.xpose.msra.mxu0 0.0
    %1655 = vmatprep.mubr.f32.mxu0 0.0
    %1656 = vmatmul.mubr.f32.gmra.mrb[0].mxu0 %v1586
    %v1657 = vpop.f32.mrb[0].mxu0
    %v1658 = vadd.f32 0.0, %v1657
    %v1659 = vpop.f32.mrb[0].mxu0
    %1660 = vdwg.mxu0
    %v1662 = vsel %vm1204, %v618, 0
    %v1665 = vsel %vm1204, %v910, 0
    %1667 = vmatprep.subr.mxu0 0.0
    %1668 = vmatpush1.xpose.msra.mxu0 %v1665
    %1669 = vmatprep.subr.mxu0 0.0
    %1670 = vmatpush1.xpose.msra.mxu0 0.0
    %1671 = vmatprep.subr.mxu0 0.0
    %1672 = vmatpush1.xpose.msra.mxu0 0.0
    %1673 = vmatprep.subr.mxu0 0.0
    %1674 = vmatpush1.xpose.msra.mxu0 0.0
    %1675 = vmatprep.subr.mxu0 0.0
    %1676 = vmatpush1.xpose.msra.mxu0 0.0
    %1677 = vmatprep.subr.mxu0 0.0
    %1678 = vmatpush1.xpose.msra.mxu0 0.0
    %1679 = vmatprep.subr.mxu0 0.0
    %1680 = vmatpush1.xpose.msra.mxu0 0.0
    %1681 = vmatprep.subr.mxu0 0.0
    %1682 = vmatpush1.xpose.msra.mxu0 0.0
    %1683 = vmatprep.subr.mxu0 0.0
    %1684 = vmatpush1.xpose.msra.mxu0 0.0
    %1685 = vmatprep.subr.mxu0 0.0
    %1686 = vmatpush1.xpose.msra.mxu0 0.0
    %1687 = vmatprep.subr.mxu0 0.0
    %1688 = vmatpush1.xpose.msra.mxu0 0.0
    %1689 = vmatprep.subr.mxu0 0.0
    %1690 = vmatpush1.xpose.msra.mxu0 0.0
    %1691 = vmatprep.subr.mxu0 0.0
    %1692 = vmatpush1.xpose.msra.mxu0 0.0
    %1693 = vmatprep.subr.mxu0 0.0
    %1694 = vmatpush1.xpose.msra.mxu0 0.0
    %1695 = vmatprep.subr.mxu0 0.0
    %1696 = vmatpush1.xpose.msra.mxu0 0.0
    %1697 = vmatprep.subr.mxu0 0.0
    %1698 = vmatpush1.xpose.msra.mxu0 0.0
    %1699 = vmatprep.subr.mxu0 0.0
    %1700 = vmatpush1.xpose.msra.mxu0 0.0
    %1701 = vmatprep.subr.mxu0 0.0
    %1702 = vmatpush1.xpose.msra.mxu0 0.0
    %1703 = vmatprep.subr.mxu0 0.0
    %1704 = vmatpush1.xpose.msra.mxu0 0.0
    %1705 = vmatprep.subr.mxu0 0.0
    %1706 = vmatpush1.xpose.msra.mxu0 0.0
    %1707 = vmatprep.subr.mxu0 0.0
    %1708 = vmatpush1.xpose.msra.mxu0 0.0
    %1709 = vmatprep.subr.mxu0 0.0
    %1710 = vmatpush1.xpose.msra.mxu0 0.0
    %1711 = vmatprep.subr.mxu0 0.0
    %1712 = vmatpush1.xpose.msra.mxu0 0.0
    %1713 = vmatprep.subr.mxu0 0.0
    %1714 = vmatpush1.xpose.msra.mxu0 0.0
    %1715 = vmatprep.subr.mxu0 0.0
    %1716 = vmatpush1.xpose.msra.mxu0 0.0
    %1717 = vmatprep.subr.mxu0 0.0
    %1718 = vmatpush1.xpose.msra.mxu0 0.0
    %1719 = vmatprep.subr.mxu0 0.0
    %1720 = vmatpush1.xpose.msra.mxu0 0.0
    %1721 = vmatprep.subr.mxu0 0.0
    %1722 = vmatpush1.xpose.msra.mxu0 0.0
    %1723 = vmatprep.subr.mxu0 0.0
    %1724 = vmatpush1.xpose.msra.mxu0 0.0
    %1725 = vmatprep.subr.mxu0 0.0
    %1726 = vmatpush1.xpose.msra.mxu0 0.0
    %1727 = vmatprep.subr.mxu0 0.0
    %1728 = vmatpush1.xpose.msra.mxu0 0.0
    %1729 = vmatprep.subr.mxu0 0.0
    %1730 = vmatpush1.xpose.msra.mxu0 0.0
    %1731 = vmatprep.mubr.f32.mxu0 0.0
    %1732 = vmatmul.mubr.f32.gmra.mrb[0].mxu0 %v1662
    %v1733 = vpop.f32.mrb[0].mxu0
    %v1734 = vadd.f32 0.0, %v1733
    %v1735 = vpop.f32.mrb[0].mxu0
    %1736 = vdwg.mxu0
    %v1738 = vsel %vm1204, %v619, 0
    %v1741 = vsel %vm1204, %v911, 0
    %1743 = vmatprep.subr.mxu0 0.0
    %1744 = vmatpush1.xpose.msra.mxu0 %v1741
    %1745 = vmatprep.subr.mxu0 0.0
    %1746 = vmatpush1.xpose.msra.mxu0 0.0
    %1747 = vmatprep.subr.mxu0 0.0
    %1748 = vmatpush1.xpose.msra.mxu0 0.0
    %1749 = vmatprep.subr.mxu0 0.0
    %1750 = vmatpush1.xpose.msra.mxu0 0.0
    %1751 = vmatprep.subr.mxu0 0.0
    %1752 = vmatpush1.xpose.msra.mxu0 0.0
    %1753 = vmatprep.subr.mxu0 0.0
    %1754 = vmatpush1.xpose.msra.mxu0 0.0
    %1755 = vmatprep.subr.mxu0 0.0
    %1756 = vmatpush1.xpose.msra.mxu0 0.0
    %1757 = vmatprep.subr.mxu0 0.0
    %1758 = vmatpush1.xpose.msra.mxu0 0.0
    %1759 = vmatprep.subr.mxu0 0.0
    %1760 = vmatpush1.xpose.msra.mxu0 0.0
    %1761 = vmatprep.subr.mxu0 0.0
    %1762 = vmatpush1.xpose.msra.mxu0 0.0
    %1763 = vmatprep.subr.mxu0 0.0
    %1764 = vmatpush1.xpose.msra.mxu0 0.0
    %1765 = vmatprep.subr.mxu0 0.0
    %1766 = vmatpush1.xpose.msra.mxu0 0.0
    %1767 = vmatprep.subr.mxu0 0.0
    %1768 = vmatpush1.xpose.msra.mxu0 0.0
    %1769 = vmatprep.subr.mxu0 0.0
    %1770 = vmatpush1.xpose.msra.mxu0 0.0
    %1771 = vmatprep.subr.mxu0 0.0
    %1772 = vmatpush1.xpose.msra.mxu0 0.0
    %1773 = vmatprep.subr.mxu0 0.0
    %1774 = vmatpush1.xpose.msra.mxu0 0.0
    %1775 = vmatprep.subr.mxu0 0.0
    %1776 = vmatpush1.xpose.msra.mxu0 0.0
    %1777 = vmatprep.subr.mxu0 0.0
    %1778 = vmatpush1.xpose.msra.mxu0 0.0
    %1779 = vmatprep.subr.mxu0 0.0
    %1780 = vmatpush1.xpose.msra.mxu0 0.0
    %1781 = vmatprep.subr.mxu0 0.0
    %1782 = vmatpush1.xpose.msra.mxu0 0.0
    %1783 = vmatprep.subr.mxu0 0.0
    %1784 = vmatpush1.xpose.msra.mxu0 0.0
    %1785 = vmatprep.subr.mxu0 0.0
    %1786 = vmatpush1.xpose.msra.mxu0 0.0
    %1787 = vmatprep.subr.mxu0 0.0
    %1788 = vmatpush1.xpose.msra.mxu0 0.0
    %1789 = vmatprep.subr.mxu0 0.0
    %1790 = vmatpush1.xpose.msra.mxu0 0.0
    %1791 = vmatprep.subr.mxu0 0.0
    %1792 = vmatpush1.xpose.msra.mxu0 0.0
    %1793 = vmatprep.subr.mxu0 0.0
    %1794 = vmatpush1.xpose.msra.mxu0 0.0
    %1795 = vmatprep.subr.mxu0 0.0
    %1796 = vmatpush1.xpose.msra.mxu0 0.0
    %1797 = vmatprep.subr.mxu0 0.0
    %1798 = vmatpush1.xpose.msra.mxu0 0.0
    %1799 = vmatprep.subr.mxu0 0.0
    %1800 = vmatpush1.xpose.msra.mxu0 0.0
    %1801 = vmatprep.subr.mxu0 0.0
    %1802 = vmatpush1.xpose.msra.mxu0 0.0
    %1803 = vmatprep.subr.mxu0 0.0
    %1804 = vmatpush1.xpose.msra.mxu0 0.0
    %1805 = vmatprep.subr.mxu0 0.0
    %1806 = vmatpush1.xpose.msra.mxu0 0.0
    %1807 = vmatprep.mubr.f32.mxu0 0.0
    %1808 = vmatmul.mubr.f32.gmra.mrb[0].mxu0 %v1738
    %v1809 = vpop.f32.mrb[0].mxu0
    %v1810 = vadd.f32 0.0, %v1809
    %v1811 = vpop.f32.mrb[0].mxu0
    %1812 = vdwg.mxu0
    %v1813 = vlaneseq
    %v1814 = vshrl.u32 %v1813, 7
    %v1815 = vlaneseq
    %v1816 = vand.u32 %v1815, 127
    %vm1817 = vcmp.ge.s32.totalorder %v1814, %v1816
    %v1818 = vsel %vm1817, 1, 0
    %vm1819 = vcmp.eq.s32.totalorder %v1818, 1
    %v1820 = vsel %vm1819, %v1278, -inf
    %v1821 = vsel %vm1819, %v1354, -inf
    %v1822 = vsel %vm1819, %v1430, -inf
    %v1823 = vsel %vm1819, %v1506, -inf
    %v1824 = vsel %vm1819, %v1582, -inf
    %v1825 = vsel %vm1819, %v1658, -inf
    %v1826 = vsel %vm1819, %v1734, -inf
    %v1827 = vsel %vm1819, %v1810, -inf
    %v1828 = vsel %vm1204, %v1820, -inf
    %1829 = vmax.xlane.f32.xlu0 %v1828
    %v1830 = vpop.xlane.xlu0 %1829
    %v1831 = vsel %vm1204, %v1821, -inf
    %1832 = vmax.xlane.f32.xlu0 %v1831
    %v1833 = vpop.xlane.xlu0 %1832
    %v1834 = vsel %vm1204, %v1822, -inf
    %1835 = vmax.xlane.f32.xlu0 %v1834
    %v1836 = vpop.xlane.xlu0 %1835
    %v1837 = vsel %vm1204, %v1823, -inf
    %1838 = vmax.xlane.f32.xlu0 %v1837
    %v1839 = vpop.xlane.xlu0 %1838
    %v1840 = vsel %vm1204, %v1824, -inf
    %1841 = vmax.xlane.f32.xlu0 %v1840
    %v1842 = vpop.xlane.xlu0 %1841
    %v1843 = vsel %vm1204, %v1825, -inf
    %1844 = vmax.xlane.f32.xlu0 %v1843
    %v1845 = vpop.xlane.xlu0 %1844
    %v1846 = vsel %vm1204, %v1826, -inf
    %1847 = vmax.xlane.f32.xlu0 %v1846
    %v1848 = vpop.xlane.xlu0 %1847
    %v1849 = vsel %vm1204, %v1827, -inf
    %1850 = vmax.xlane.f32.xlu0 %v1849
    %v1851 = vpop.xlane.xlu0 %1850
    %v1852 = vsub.f32 %v1820, %v1830
    %v1853 = vsub.f32 %v1821, %v1833
    %v1854 = vsub.f32 %v1822, %v1836
    %v1855 = vsub.f32 %v1823, %v1839
    %v1856 = vsub.f32 %v1824, %v1842
    %v1857 = vsub.f32 %v1825, %v1845
    %v1858 = vsub.f32 %v1826, %v1848
    %v1859 = vsub.f32 %v1827, %v1851
    %v1860 = vmul.f32 %v1852, 1.442695
    %v1861 = vpow.pop %v1860
    %v1862 = vmul.f32 %v1853, 1.442695
    %v1863 = vpow.pop %v1862
    %v1864 = vmul.f32 %v1854, 1.442695
    %v1865 = vpow.pop %v1864
    %v1866 = vmul.f32 %v1855, 1.442695
    %v1867 = vpow.pop %v1866
    %v1868 = vmul.f32 %v1856, 1.442695
    %v1869 = vpow.pop %v1868
    %v1870 = vmul.f32 %v1857, 1.442695
    %v1871 = vpow.pop %v1870
    %v1872 = vmul.f32 %v1858, 1.442695
    %v1873 = vpow.pop %v1872
    %v1874 = vmul.f32 %v1859, 1.442695
    %v1875 = vpow.pop %v1874
    %v1876 = vsel %vm1204, %v1861, 0.0
    %1877 = vadd.xlane.f32.xlu0 %v1876
    %v1878 = vpop.xlane.xlu0 %1877
    %v1879 = vsel %vm1204, %v1863, 0.0
    %1880 = vadd.xlane.f32.xlu0 %v1879
    %v1881 = vpop.xlane.xlu0 %1880
    %v1882 = vsel %vm1204, %v1865, 0.0
    %1883 = vadd.xlane.f32.xlu0 %v1882
    %v1884 = vpop.xlane.xlu0 %1883
    %v1885 = vsel %vm1204, %v1867, 0.0
    %1886 = vadd.xlane.f32.xlu0 %v1885
    %v1887 = vpop.xlane.xlu0 %1886
    %v1888 = vsel %vm1204, %v1869, 0.0
    %1889 = vadd.xlane.f32.xlu0 %v1888
    %v1890 = vpop.xlane.xlu0 %1889
    %v1891 = vsel %vm1204, %v1871, 0.0
    %1892 = vadd.xlane.f32.xlu0 %v1891
    %v1893 = vpop.xlane.xlu0 %1892
    %v1894 = vsel %vm1204, %v1873, 0.0
    %1895 = vadd.xlane.f32.xlu0 %v1894
    %v1896 = vpop.xlane.xlu0 %1895
    %v1897 = vsel %vm1204, %v1875, 0.0
    %1898 = vadd.xlane.f32.xlu0 %v1897
    %v1899 = vpop.xlane.xlu0 %1898
    %v1900 = vrcp.pop %v1878
    %v1901 = vrcp.pop %v1881
    %v1902 = vrcp.pop %v1884
    %v1903 = vrcp.pop %v1887
    %v1904 = vrcp.pop %v1890
    %v1905 = vrcp.pop %v1893
    %v1906 = vrcp.pop %v1896
    %v1907 = vrcp.pop %v1899
    %v1908 = vmul.f32 %v1861, %v1900
    %v1909 = vmul.f32 %v1863, %v1901
    %v1910 = vmul.f32 %v1865, %v1902
    %v1911 = vmul.f32 %v1867, %v1903
    %v1912 = vmul.f32 %v1869, %v1904
    %v1913 = vmul.f32 %v1871, %v1905
    %v1914 = vmul.f32 %v1873, %v1906
    %v1915 = vmul.f32 %v1875, %v1907
    %v1917 = vsel %vm1204, %v1908, 0
    %1919 = vmatprep.subr.mxu0 0.0
    %1920 = vmatpush1.msra.mxu0 %v1132
    %1921 = vmatprep.subr.mxu0 0.0
    %1922 = vmatpush1.msra.mxu0 0.0
    %1923 = vmatprep.subr.mxu0 0.0
    %1924 = vmatpush1.msra.mxu0 0.0
    %1925 = vmatprep.subr.mxu0 0.0
    %1926 = vmatpush1.msra.mxu0 0.0
    %1927 = vmatprep.subr.mxu0 0.0
    %1928 = vmatpush1.msra.mxu0 0.0
    %1929 = vmatprep.subr.mxu0 0.0
    %1930 = vmatpush1.msra.mxu0 0.0
    %1931 = vmatprep.subr.mxu0 0.0
    %1932 = vmatpush1.msra.mxu0 0.0
    %1933 = vmatprep.subr.mxu0 0.0
    %1934 = vmatpush1.msra.mxu0 0.0
    %1935 = vmatprep.subr.mxu0 0.0
    %1936 = vmatpush1.msra.mxu0 0.0
    %1937 = vmatprep.subr.mxu0 0.0
    %1938 = vmatpush1.msra.mxu0 0.0
    %1939 = vmatprep.subr.mxu0 0.0
    %1940 = vmatpush1.msra.mxu0 0.0
    %1941 = vmatprep.subr.mxu0 0.0
    %1942 = vmatpush1.msra.mxu0 0.0
    %1943 = vmatprep.subr.mxu0 0.0
    %1944 = vmatpush1.msra.mxu0 0.0
    %1945 = vmatprep.subr.mxu0 0.0
    %1946 = vmatpush1.msra.mxu0 0.0
    %1947 = vmatprep.subr.mxu0 0.0
    %1948 = vmatpush1.msra.mxu0 0.0
    %1949 = vmatprep.subr.mxu0 0.0
    %1950 = vmatpush1.msra.mxu0 0.0
    %1951 = vmatprep.subr.mxu0 0.0
    %1952 = vmatpush1.msra.mxu0 0.0
    %1953 = vmatprep.subr.mxu0 0.0
    %1954 = vmatpush1.msra.mxu0 0.0
    %1955 = vmatprep.subr.mxu0 0.0
    %1956 = vmatpush1.msra.mxu0 0.0
    %1957 = vmatprep.subr.mxu0 0.0
    %1958 = vmatpush1.msra.mxu0 0.0
    %1959 = vmatprep.subr.mxu0 0.0
    %1960 = vmatpush1.msra.mxu0 0.0
    %1961 = vmatprep.subr.mxu0 0.0
    %1962 = vmatpush1.msra.mxu0 0.0
    %1963 = vmatprep.subr.mxu0 0.0
    %1964 = vmatpush1.msra.mxu0 0.0
    %1965 = vmatprep.subr.mxu0 0.0
    %1966 = vmatpush1.msra.mxu0 0.0
    %1967 = vmatprep.subr.mxu0 0.0
    %1968 = vmatpush1.msra.mxu0 0.0
    %1969 = vmatprep.subr.mxu0 0.0
    %1970 = vmatpush1.msra.mxu0 0.0
    %1971 = vmatprep.subr.mxu0 0.0
    %1972 = vmatpush1.msra.mxu0 0.0
    %1973 = vmatprep.subr.mxu0 0.0
    %1974 = vmatpush1.msra.mxu0 0.0
    %1975 = vmatprep.subr.mxu0 0.0
    %1976 = vmatpush1.msra.mxu0 0.0
    %1977 = vmatprep.subr.mxu0 0.0
    %1978 = vmatpush1.msra.mxu0 0.0
    %1979 = vmatprep.subr.mxu0 0.0
    %1980 = vmatpush1.msra.mxu0 0.0
    %1981 = vmatprep.subr.mxu0 0.0
    %1982 = vmatpush1.msra.mxu0 0.0
    %1983 = vmatprep.mubr.f32.mxu0 0.0
    %1984 = vmatmul.mubr.f32.gmra.mrb[0].mxu0 %v1917
    %v1985 = vpop.f32.mrb[0].mxu0
    %v1986 = vadd.f32 0.0, %v1985
    %v1987 = vpop.f32.mrb[0].mxu0
    %1988 = vdwg.mxu0
    %v1990 = vsel %vm1204, %v1909, 0
    %1992 = vmatprep.subr.mxu0 0.0
    %1993 = vmatpush1.msra.mxu0 %v1133
    %1994 = vmatprep.subr.mxu0 0.0
    %1995 = vmatpush1.msra.mxu0 0.0
    %1996 = vmatprep.subr.mxu0 0.0
    %1997 = vmatpush1.msra.mxu0 0.0
    %1998 = vmatprep.subr.mxu0 0.0
    %1999 = vmatpush1.msra.mxu0 0.0
    %2000 = vmatprep.subr.mxu0 0.0
    %2001 = vmatpush1.msra.mxu0 0.0
    %2002 = vmatprep.subr.mxu0 0.0
    %2003 = vmatpush1.msra.mxu0 0.0
    %2004 = vmatprep.subr.mxu0 0.0
    %2005 = vmatpush1.msra.mxu0 0.0
    %2006 = vmatprep.subr.mxu0 0.0
    %2007 = vmatpush1.msra.mxu0 0.0
    %2008 = vmatprep.subr.mxu0 0.0
    %2009 = vmatpush1.msra.mxu0 0.0
    %2010 = vmatprep.subr.mxu0 0.0
    %2011 = vmatpush1.msra.mxu0 0.0
    %2012 = vmatprep.subr.mxu0 0.0
    %2013 = vmatpush1.msra.mxu0 0.0
    %2014 = vmatprep.subr.mxu0 0.0
    %2015 = vmatpush1.msra.mxu0 0.0
    %2016 = vmatprep.subr.mxu0 0.0
    %2017 = vmatpush1.msra.mxu0 0.0
    %2018 = vmatprep.subr.mxu0 0.0
    %2019 = vmatpush1.msra.mxu0 0.0
    %2020 = vmatprep.subr.mxu0 0.0
    %2021 = vmatpush1.msra.mxu0 0.0
    %2022 = vmatprep.subr.mxu0 0.0
    %2023 = vmatpush1.msra.mxu0 0.0
    %2024 = vmatprep.subr.mxu0 0.0
    %2025 = vmatpush1.msra.mxu0 0.0
    %2026 = vmatprep.subr.mxu0 0.0
    %2027 = vmatpush1.msra.mxu0 0.0
    %2028 = vmatprep.subr.mxu0 0.0
    %2029 = vmatpush1.msra.mxu0 0.0
    %2030 = vmatprep.subr.mxu0 0.0
    %2031 = vmatpush1.msra.mxu0 0.0
    %2032 = vmatprep.subr.mxu0 0.0
    %2033 = vmatpush1.msra.mxu0 0.0
    %2034 = vmatprep.subr.mxu0 0.0
    %2035 = vmatpush1.msra.mxu0 0.0
    %2036 = vmatprep.subr.mxu0 0.0
    %2037 = vmatpush1.msra.mxu0 0.0
    %2038 = vmatprep.subr.mxu0 0.0
    %2039 = vmatpush1.msra.mxu0 0.0
    %2040 = vmatprep.subr.mxu0 0.0
    %2041 = vmatpush1.msra.mxu0 0.0
    %2042 = vmatprep.subr.mxu0 0.0
    %2043 = vmatpush1.msra.mxu0 0.0
    %2044 = vmatprep.subr.mxu0 0.0
    %2045 = vmatpush1.msra.mxu0 0.0
    %2046 = vmatprep.subr.mxu0 0.0
    %2047 = vmatpush1.msra.mxu0 0.0
    %2048 = vmatprep.subr.mxu0 0.0
    %2049 = vmatpush1.msra.mxu0 0.0
    %2050 = vmatprep.subr.mxu0 0.0
    %2051 = vmatpush1.msra.mxu0 0.0
    %2052 = vmatprep.subr.mxu0 0.0
    %2053 = vmatpush1.msra.mxu0 0.0
    %2054 = vmatprep.subr.mxu0 0.0
    %2055 = vmatpush1.msra.mxu0 0.0
    %2056 = vmatprep.mubr.f32.mxu0 0.0
    %2057 = vmatmul.mubr.f32.gmra.mrb[0].mxu0 %v1990
    %v2058 = vpop.f32.mrb[0].mxu0
    %v2059 = vadd.f32 0.0, %v2058
    %v2060 = vpop.f32.mrb[0].mxu0
    %2061 = vdwg.mxu0
    %v2063 = vsel %vm1204, %v1910, 0
    %2065 = vmatprep.subr.mxu0 0.0
    %2066 = vmatpush1.msra.mxu0 %v1134
    %2067 = vmatprep.subr.mxu0 0.0
    %2068 = vmatpush1.msra.mxu0 0.0
    %2069 = vmatprep.subr.mxu0 0.0
    %2070 = vmatpush1.msra.mxu0 0.0
    %2071 = vmatprep.subr.mxu0 0.0
    %2072 = vmatpush1.msra.mxu0 0.0
    %2073 = vmatprep.subr.mxu0 0.0
    %2074 = vmatpush1.msra.mxu0 0.0
    %2075 = vmatprep.subr.mxu0 0.0
    %2076 = vmatpush1.msra.mxu0 0.0
    %2077 = vmatprep.subr.mxu0 0.0
    %2078 = vmatpush1.msra.mxu0 0.0
    %2079 = vmatprep.subr.mxu0 0.0
    %2080 = vmatpush1.msra.mxu0 0.0
    %2081 = vmatprep.subr.mxu0 0.0
    %2082 = vmatpush1.msra.mxu0 0.0
    %2083 = vmatprep.subr.mxu0 0.0
    %2084 = vmatpush1.msra.mxu0 0.0
    %2085 = vmatprep.subr.mxu0 0.0
    %2086 = vmatpush1.msra.mxu0 0.0
    %2087 = vmatprep.subr.mxu0 0.0
    %2088 = vmatpush1.msra.mxu0 0.0
    %2089 = vmatprep.subr.mxu0 0.0
    %2090 = vmatpush1.msra.mxu0 0.0
    %2091 = vmatprep.subr.mxu0 0.0
    %2092 = vmatpush1.msra.mxu0 0.0
    %2093 = vmatprep.subr.mxu0 0.0
    %2094 = vmatpush1.msra.mxu0 0.0
    %2095 = vmatprep.subr.mxu0 0.0
    %2096 = vmatpush1.msra.mxu0 0.0
    %2097 = vmatprep.subr.mxu0 0.0
    %2098 = vmatpush1.msra.mxu0 0.0
    %2099 = vmatprep.subr.mxu0 0.0
    %2100 = vmatpush1.msra.mxu0 0.0
    %2101 = vmatprep.subr.mxu0 0.0
    %2102 = vmatpush1.msra.mxu0 0.0
    %2103 = vmatprep.subr.mxu0 0.0
    %2104 = vmatpush1.msra.mxu0 0.0
    %2105 = vmatprep.subr.mxu0 0.0
    %2106 = vmatpush1.msra.mxu0 0.0
    %2107 = vmatprep.subr.mxu0 0.0
    %2108 = vmatpush1.msra.mxu0 0.0
    %2109 = vmatprep.subr.mxu0 0.0
    %2110 = vmatpush1.msra.mxu0 0.0
    %2111 = vmatprep.subr.mxu0 0.0
    %2112 = vmatpush1.msra.mxu0 0.0
    %2113 = vmatprep.subr.mxu0 0.0
    %2114 = vmatpush1.msra.mxu0 0.0
    %2115 = vmatprep.subr.mxu0 0.0
    %2116 = vmatpush1.msra.mxu0 0.0
    %2117 = vmatprep.subr.mxu0 0.0
    %2118 = vmatpush1.msra.mxu0 0.0
    %2119 = vmatprep.subr.mxu0 0.0
    %2120 = vmatpush1.msra.mxu0 0.0
    %2121 = vmatprep.subr.mxu0 0.0
    %2122 = vmatpush1.msra.mxu0 0.0
    %2123 = vmatprep.subr.mxu0 0.0
    %2124 = vmatpush1.msra.mxu0 0.0
    %2125 = vmatprep.subr.mxu0 0.0
    %2126 = vmatpush1.msra.mxu0 0.0
    %2127 = vmatprep.subr.mxu0 0.0
    %2128 = vmatpush1.msra.mxu0 0.0
    %2129 = vmatprep.mubr.f32.mxu0 0.0
    %2130 = vmatmul.mubr.f32.gmra.mrb[0].mxu0 %v2063
    %v2131 = vpop.f32.mrb[0].mxu0
    %v2132 = vadd.f32 0.0, %v2131
    %v2133 = vpop.f32.mrb[0].mxu0
    %2134 = vdwg.mxu0
    %v2136 = vsel %vm1204, %v1911, 0
    %2138 = vmatprep.subr.mxu0 0.0
    %2139 = vmatpush1.msra.mxu0 %v1135
    %2140 = vmatprep.subr.mxu0 0.0
    %2141 = vmatpush1.msra.mxu0 0.0
    %2142 = vmatprep.subr.mxu0 0.0
    %2143 = vmatpush1.msra.mxu0 0.0
    %2144 = vmatprep.subr.mxu0 0.0
    %2145 = vmatpush1.msra.mxu0 0.0
    %2146 = vmatprep.subr.mxu0 0.0
    %2147 = vmatpush1.msra.mxu0 0.0
    %2148 = vmatprep.subr.mxu0 0.0
    %2149 = vmatpush1.msra.mxu0 0.0
    %2150 = vmatprep.subr.mxu0 0.0
    %2151 = vmatpush1.msra.mxu0 0.0
    %2152 = vmatprep.subr.mxu0 0.0
    %2153 = vmatpush1.msra.mxu0 0.0
    %2154 = vmatprep.subr.mxu0 0.0
    %2155 = vmatpush1.msra.mxu0 0.0
    %2156 = vmatprep.subr.mxu0 0.0
    %2157 = vmatpush1.msra.mxu0 0.0
    %2158 = vmatprep.subr.mxu0 0.0
    %2159 = vmatpush1.msra.mxu0 0.0
    %2160 = vmatprep.subr.mxu0 0.0
    %2161 = vmatpush1.msra.mxu0 0.0
    %2162 = vmatprep.subr.mxu0 0.0
    %2163 = vmatpush1.msra.mxu0 0.0
    %2164 = vmatprep.subr.mxu0 0.0
    %2165 = vmatpush1.msra.mxu0 0.0
    %2166 = vmatprep.subr.mxu0 0.0
    %2167 = vmatpush1.msra.mxu0 0.0
    %2168 = vmatprep.subr.mxu0 0.0
    %2169 = vmatpush1.msra.mxu0 0.0
    %2170 = vmatprep.subr.mxu0 0.0
    %2171 = vmatpush1.msra.mxu0 0.0
    %2172 = vmatprep.subr.mxu0 0.0
    %2173 = vmatpush1.msra.mxu0 0.0
    %2174 = vmatprep.subr.mxu0 0.0
    %2175 = vmatpush1.msra.mxu0 0.0
    %2176 = vmatprep.subr.mxu0 0.0
    %2177 = vmatpush1.msra.mxu0 0.0
    %2178 = vmatprep.subr.mxu0 0.0
    %2179 = vmatpush1.msra.mxu0 0.0
    %2180 = vmatprep.subr.mxu0 0.0
    %2181 = vmatpush1.msra.mxu0 0.0
    %2182 = vmatprep.subr.mxu0 0.0
    %2183 = vmatpush1.msra.mxu0 0.0
    %2184 = vmatprep.subr.mxu0 0.0
    %2185 = vmatpush1.msra.mxu0 0.0
    %2186 = vmatprep.subr.mxu0 0.0
    %2187 = vmatpush1.msra.mxu0 0.0
    %2188 = vmatprep.subr.mxu0 0.0
    %2189 = vmatpush1.msra.mxu0 0.0
    %2190 = vmatprep.subr.mxu0 0.0
    %2191 = vmatpush1.msra.mxu0 0.0
    %2192 = vmatprep.subr.mxu0 0.0
    %2193 = vmatpush1.msra.mxu0 0.0
    %2194 = vmatprep.subr.mxu0 0.0
    %2195 = vmatpush1.msra.mxu0 0.0
    %2196 = vmatprep.subr.mxu0 0.0
    %2197 = vmatpush1.msra.mxu0 0.0
    %2198 = vmatprep.subr.mxu0 0.0
    %2199 = vmatpush1.msra.mxu0 0.0
    %2200 = vmatprep.subr.mxu0 0.0
    %2201 = vmatpush1.msra.mxu0 0.0
    %2202 = vmatprep.mubr.f32.mxu0 0.0
    %2203 = vmatmul.mubr.f32.gmra.mrb[0].mxu0 %v2136
    %v2204 = vpop.f32.mrb[0].mxu0
    %v2205 = vadd.f32 0.0, %v2204
    %v2206 = vpop.f32.mrb[0].mxu0
    %2207 = vdwg.mxu0
    %v2209 = vsel %vm1204, %v1912, 0
    %2211 = vmatprep.subr.mxu0 0.0
    %2212 = vmatpush1.msra.mxu0 %v1200
    %2213 = vmatprep.subr.mxu0 0.0
    %2214 = vmatpush1.msra.mxu0 0.0
    %2215 = vmatprep.subr.mxu0 0.0
    %2216 = vmatpush1.msra.mxu0 0.0
    %2217 = vmatprep.subr.mxu0 0.0
    %2218 = vmatpush1.msra.mxu0 0.0
    %2219 = vmatprep.subr.mxu0 0.0
    %2220 = vmatpush1.msra.mxu0 0.0
    %2221 = vmatprep.subr.mxu0 0.0
    %2222 = vmatpush1.msra.mxu0 0.0
    %2223 = vmatprep.subr.mxu0 0.0
    %2224 = vmatpush1.msra.mxu0 0.0
    %2225 = vmatprep.subr.mxu0 0.0
    %2226 = vmatpush1.msra.mxu0 0.0
    %2227 = vmatprep.subr.mxu0 0.0
    %2228 = vmatpush1.msra.mxu0 0.0
    %2229 = vmatprep.subr.mxu0 0.0
    %2230 = vmatpush1.msra.mxu0 0.0
    %2231 = vmatprep.subr.mxu0 0.0
    %2232 = vmatpush1.msra.mxu0 0.0
    %2233 = vmatprep.subr.mxu0 0.0
    %2234 = vmatpush1.msra.mxu0 0.0
    %2235 = vmatprep.subr.mxu0 0.0
    %2236 = vmatpush1.msra.mxu0 0.0
    %2237 = vmatprep.subr.mxu0 0.0
    %2238 = vmatpush1.msra.mxu0 0.0
    %2239 = vmatprep.subr.mxu0 0.0
    %2240 = vmatpush1.msra.mxu0 0.0
    %2241 = vmatprep.subr.mxu0 0.0
    %2242 = vmatpush1.msra.mxu0 0.0
    %2243 = vmatprep.subr.mxu0 0.0
    %2244 = vmatpush1.msra.mxu0 0.0
    %2245 = vmatprep.subr.mxu0 0.0
    %2246 = vmatpush1.msra.mxu0 0.0
    %2247 = vmatprep.subr.mxu0 0.0
    %2248 = vmatpush1.msra.mxu0 0.0
    %2249 = vmatprep.subr.mxu0 0.0
    %2250 = vmatpush1.msra.mxu0 0.0
    %2251 = vmatprep.subr.mxu0 0.0
    %2252 = vmatpush1.msra.mxu0 0.0
    %2253 = vmatprep.subr.mxu0 0.0
    %2254 = vmatpush1.msra.mxu0 0.0
    %2255 = vmatprep.subr.mxu0 0.0
    %2256 = vmatpush1.msra.mxu0 0.0
    %2257 = vmatprep.subr.mxu0 0.0
    %2258 = vmatpush1.msra.mxu0 0.0
    %2259 = vmatprep.subr.mxu0 0.0
    %2260 = vmatpush1.msra.mxu0 0.0
    %2261 = vmatprep.subr.mxu0 0.0
    %2262 = vmatpush1.msra.mxu0 0.0
    %2263 = vmatprep.subr.mxu0 0.0
    %2264 = vmatpush1.msra.mxu0 0.0
    %2265 = vmatprep.subr.mxu0 0.0
    %2266 = vmatpush1.msra.mxu0 0.0
    %2267 = vmatprep.subr.mxu0 0.0
    %2268 = vmatpush1.msra.mxu0 0.0
    %2269 = vmatprep.subr.mxu0 0.0
    %2270 = vmatpush1.msra.mxu0 0.0
    %2271 = vmatprep.subr.mxu0 0.0
    %2272 = vmatpush1.msra.mxu0 0.0
    %2273 = vmatprep.subr.mxu0 0.0
    %2274 = vmatpush1.msra.mxu0 0.0
    %2275 = vmatprep.mubr.f32.mxu0 0.0
    %2276 = vmatmul.mubr.f32.gmra.mrb[0].mxu0 %v2209
    %v2277 = vpop.f32.mrb[0].mxu0
    %v2278 = vadd.f32 0.0, %v2277
    %v2279 = vpop.f32.mrb[0].mxu0
    %2280 = vdwg.mxu0
    %v2282 = vsel %vm1204, %v1913, 0
    %2284 = vmatprep.subr.mxu0 0.0
    %2285 = vmatpush1.msra.mxu0 %v1201
    %2286 = vmatprep.subr.mxu0 0.0
    %2287 = vmatpush1.msra.mxu0 0.0
    %2288 = vmatprep.subr.mxu0 0.0
    %2289 = vmatpush1.msra.mxu0 0.0
    %2290 = vmatprep.subr.mxu0 0.0
    %2291 = vmatpush1.msra.mxu0 0.0
    %2292 = vmatprep.subr.mxu0 0.0
    %2293 = vmatpush1.msra.mxu0 0.0
    %2294 = vmatprep.subr.mxu0 0.0
    %2295 = vmatpush1.msra.mxu0 0.0
    %2296 = vmatprep.subr.mxu0 0.0
    %2297 = vmatpush1.msra.mxu0 0.0
    %2298 = vmatprep.subr.mxu0 0.0
    %2299 = vmatpush1.msra.mxu0 0.0
    %2300 = vmatprep.subr.mxu0 0.0
    %2301 = vmatpush1.msra.mxu0 0.0
    %2302 = vmatprep.subr.mxu0 0.0
    %2303 = vmatpush1.msra.mxu0 0.0
    %2304 = vmatprep.subr.mxu0 0.0
    %2305 = vmatpush1.msra.mxu0 0.0
    %2306 = vmatprep.subr.mxu0 0.0
    %2307 = vmatpush1.msra.mxu0 0.0
    %2308 = vmatprep.subr.mxu0 0.0
    %2309 = vmatpush1.msra.mxu0 0.0
    %2310 = vmatprep.subr.mxu0 0.0
    %2311 = vmatpush1.msra.mxu0 0.0
    %2312 = vmatprep.subr.mxu0 0.0
    %2313 = vmatpush1.msra.mxu0 0.0
    %2314 = vmatprep.subr.mxu0 0.0
    %2315 = vmatpush1.msra.mxu0 0.0
    %2316 = vmatprep.subr.mxu0 0.0
    %2317 = vmatpush1.msra.mxu0 0.0
    %2318 = vmatprep.subr.mxu0 0.0
    %2319 = vmatpush1.msra.mxu0 0.0
    %2320 = vmatprep.subr.mxu0 0.0
    %2321 = vmatpush1.msra.mxu0 0.0
    %2322 = vmatprep.subr.mxu0 0.0
    %2323 = vmatpush1.msra.mxu0 0.0
    %2324 = vmatprep.subr.mxu0 0.0
    %2325 = vmatpush1.msra.mxu0 0.0
    %2326 = vmatprep.subr.mxu0 0.0
    %2327 = vmatpush1.msra.mxu0 0.0
    %2328 = vmatprep.subr.mxu0 0.0
    %2329 = vmatpush1.msra.mxu0 0.0
    %2330 = vmatprep.subr.mxu0 0.0
    %2331 = vmatpush1.msra.mxu0 0.0
    %2332 = vmatprep.subr.mxu0 0.0
    %2333 = vmatpush1.msra.mxu0 0.0
    %2334 = vmatprep.subr.mxu0 0.0
    %2335 = vmatpush1.msra.mxu0 0.0
    %2336 = vmatprep.subr.mxu0 0.0
    %2337 = vmatpush1.msra.mxu0 0.0
    %2338 = vmatprep.subr.mxu0 0.0
    %2339 = vmatpush1.msra.mxu0 0.0
    %2340 = vmatprep.subr.mxu0 0.0
    %2341 = vmatpush1.msra.mxu0 0.0
    %2342 = vmatprep.subr.mxu0 0.0
    %2343 = vmatpush1.msra.mxu0 0.0
    %2344 = vmatprep.subr.mxu0 0.0
    %2345 = vmatpush1.msra.mxu0 0.0
    %2346 = vmatprep.subr.mxu0 0.0
    %2347 = vmatpush1.msra.mxu0 0.0
    %2348 = vmatprep.mubr.f32.mxu0 0.0
    %2349 = vmatmul.mubr.f32.gmra.mrb[0].mxu0 %v2282
    %v2350 = vpop.f32.mrb[0].mxu0
    %v2351 = vadd.f32 0.0, %v2350
    %v2352 = vpop.f32.mrb[0].mxu0
    %2353 = vdwg.mxu0
    %v2355 = vsel %vm1204, %v1914, 0
    %2357 = vmatprep.subr.mxu0 0.0
    %2358 = vmatpush1.msra.mxu0 %v1202
    %2359 = vmatprep.subr.mxu0 0.0
    %2360 = vmatpush1.msra.mxu0 0.0
    %2361 = vmatprep.subr.mxu0 0.0
    %2362 = vmatpush1.msra.mxu0 0.0
    %2363 = vmatprep.subr.mxu0 0.0
    %2364 = vmatpush1.msra.mxu0 0.0
    %2365 = vmatprep.subr.mxu0 0.0
    %2366 = vmatpush1.msra.mxu0 0.0
    %2367 = vmatprep.subr.mxu0 0.0
    %2368 = vmatpush1.msra.mxu0 0.0
    %2369 = vmatprep.subr.mxu0 0.0
    %2370 = vmatpush1.msra.mxu0 0.0
    %2371 = vmatprep.subr.mxu0 0.0
    %2372 = vmatpush1.msra.mxu0 0.0
    %2373 = vmatprep.subr.mxu0 0.0
    %2374 = vmatpush1.msra.mxu0 0.0
    %2375 = vmatprep.subr.mxu0 0.0
    %2376 = vmatpush1.msra.mxu0 0.0
    %2377 = vmatprep.subr.mxu0 0.0
    %2378 = vmatpush1.msra.mxu0 0.0
    %2379 = vmatprep.subr.mxu0 0.0
    %2380 = vmatpush1.msra.mxu0 0.0
    %2381 = vmatprep.subr.mxu0 0.0
    %2382 = vmatpush1.msra.mxu0 0.0
    %2383 = vmatprep.subr.mxu0 0.0
    %2384 = vmatpush1.msra.mxu0 0.0
    %2385 = vmatprep.subr.mxu0 0.0
    %2386 = vmatpush1.msra.mxu0 0.0
    %2387 = vmatprep.subr.mxu0 0.0
    %2388 = vmatpush1.msra.mxu0 0.0
    %2389 = vmatprep.subr.mxu0 0.0
    %2390 = vmatpush1.msra.mxu0 0.0
    %2391 = vmatprep.subr.mxu0 0.0
    %2392 = vmatpush1.msra.mxu0 0.0
    %2393 = vmatprep.subr.mxu0 0.0
    %2394 = vmatpush1.msra.mxu0 0.0
    %2395 = vmatprep.subr.mxu0 0.0
    %2396 = vmatpush1.msra.mxu0 0.0
    %2397 = vmatprep.subr.mxu0 0.0
    %2398 = vmatpush1.msra.mxu0 0.0
    %2399 = vmatprep.subr.mxu0 0.0
    %2400 = vmatpush1.msra.mxu0 0.0
    %2401 = vmatprep.subr.mxu0 0.0
    %2402 = vmatpush1.msra.mxu0 0.0
    %2403 = vmatprep.subr.mxu0 0.0
    %2404 = vmatpush1.msra.mxu0 0.0
    %2405 = vmatprep.subr.mxu0 0.0
    %2406 = vmatpush1.msra.mxu0 0.0
    %2407 = vmatprep.subr.mxu0 0.0
    %2408 = vmatpush1.msra.mxu0 0.0
    %2409 = vmatprep.subr.mxu0 0.0
    %2410 = vmatpush1.msra.mxu0 0.0
    %2411 = vmatprep.subr.mxu0 0.0
    %2412 = vmatpush1.msra.mxu0 0.0
    %2413 = vmatprep.subr.mxu0 0.0
    %2414 = vmatpush1.msra.mxu0 0.0
    %2415 = vmatprep.subr.mxu0 0.0
    %2416 = vmatpush1.msra.mxu0 0.0
    %2417 = vmatprep.subr.mxu0 0.0
    %2418 = vmatpush1.msra.mxu0 0.0
    %2419 = vmatprep.subr.mxu0 0.0
    %2420 = vmatpush1.msra.mxu0 0.0
    %2421 = vmatprep.mubr.f32.mxu0 0.0
    %2422 = vmatmul.mubr.f32.gmra.mrb[0].mxu0 %v2355
    %v2423 = vpop.f32.mrb[0].mxu0
    %v2424 = vadd.f32 0.0, %v2423
    %v2425 = vpop.f32.mrb[0].mxu0
    %2426 = vdwg.mxu0
    %v2428 = vsel %vm1204, %v1915, 0
    %2430 = vmatprep.subr.mxu0 0.0
    %2431 = vmatpush1.msra.mxu0 %v1203
    %2432 = vmatprep.subr.mxu0 0.0
    %2433 = vmatpush1.msra.mxu0 0.0
    %2434 = vmatprep.subr.mxu0 0.0
    %2435 = vmatpush1.msra.mxu0 0.0
    %2436 = vmatprep.subr.mxu0 0.0
    %2437 = vmatpush1.msra.mxu0 0.0
    %2438 = vmatprep.subr.mxu0 0.0
    %2439 = vmatpush1.msra.mxu0 0.0
    %2440 = vmatprep.subr.mxu0 0.0
    %2441 = vmatpush1.msra.mxu0 0.0
    %2442 = vmatprep.subr.mxu0 0.0
    %2443 = vmatpush1.msra.mxu0 0.0
    %2444 = vmatprep.subr.mxu0 0.0
    %2445 = vmatpush1.msra.mxu0 0.0
    %2446 = vmatprep.subr.mxu0 0.0
    %2447 = vmatpush1.msra.mxu0 0.0
    %2448 = vmatprep.subr.mxu0 0.0
    %2449 = vmatpush1.msra.mxu0 0.0
    %2450 = vmatprep.subr.mxu0 0.0
    %2451 = vmatpush1.msra.mxu0 0.0
    %2452 = vmatprep.subr.mxu0 0.0
    %2453 = vmatpush1.msra.mxu0 0.0
    %2454 = vmatprep.subr.mxu0 0.0
    %2455 = vmatpush1.msra.mxu0 0.0
    %2456 = vmatprep.subr.mxu0 0.0
    %2457 = vmatpush1.msra.mxu0 0.0
    %2458 = vmatprep.subr.mxu0 0.0
    %2459 = vmatpush1.msra.mxu0 0.0
    %2460 = vmatprep.subr.mxu0 0.0
    %2461 = vmatpush1.msra.mxu0 0.0
    %2462 = vmatprep.subr.mxu0 0.0
    %2463 = vmatpush1.msra.mxu0 0.0
    %2464 = vmatprep.subr.mxu0 0.0
    %2465 = vmatpush1.msra.mxu0 0.0
    %2466 = vmatprep.subr.mxu0 0.0
    %2467 = vmatpush1.msra.mxu0 0.0
    %2468 = vmatprep.subr.mxu0 0.0
    %2469 = vmatpush1.msra.mxu0 0.0
    %2470 = vmatprep.subr.mxu0 0.0
    %2471 = vmatpush1.msra.mxu0 0.0
    %2472 = vmatprep.subr.mxu0 0.0
    %2473 = vmatpush1.msra.mxu0 0.0
    %2474 = vmatprep.subr.mxu0 0.0
    %2475 = vmatpush1.msra.mxu0 0.0
    %2476 = vmatprep.subr.mxu0 0.0
    %2477 = vmatpush1.msra.mxu0 0.0
    %2478 = vmatprep.subr.mxu0 0.0
    %2479 = vmatpush1.msra.mxu0 0.0
    %2480 = vmatprep.subr.mxu0 0.0
    %2481 = vmatpush1.msra.mxu0 0.0
    %2482 = vmatprep.subr.mxu0 0.0
    %2483 = vmatpush1.msra.mxu0 0.0
    %2484 = vmatprep.subr.mxu0 0.0
    %2485 = vmatpush1.msra.mxu0 0.0
    %2486 = vmatprep.subr.mxu0 0.0
    %2487 = vmatpush1.msra.mxu0 0.0
    %2488 = vmatprep.subr.mxu0 0.0
    %2489 = vmatpush1.msra.mxu0 0.0
    %2490 = vmatprep.subr.mxu0 0.0
    %2491 = vmatpush1.msra.mxu0 0.0
    %2492 = vmatprep.subr.mxu0 0.0
    %2493 = vmatpush1.msra.mxu0 0.0
    %2494 = vmatprep.mubr.f32.mxu0 0.0
    %2495 = vmatmul.mubr.f32.gmra.mrb[0].mxu0 %v2428
    %v2496 = vpop.f32.mrb[0].mxu0
    %v2497 = vadd.f32 0.0, %v2496
    %v2498 = vpop.f32.mrb[0].mxu0
    %2499 = vdwg.mxu0
    %v2500 = vcombine.low %v1986, %v2132
    %v2501 = vcombine.high %v1986, %v2132
    %v2503 = vunpack.c.l.s4 1983009808
    %v2504 = vunpack.c.0.s8 %v2503
    %v2505 = vlaneseq
    %v2506 = vshrl.u32 %v2505, 7
    %v2507 = vsub.s32 %v2504, %v2506
    %v2508 = vrot.slane %v2500, %v2507
    %v2510 = vunpack.c.l.s4 1983009808
    %v2511 = vunpack.c.0.s8 %v2510
    %v2512 = vlaneseq
    %v2513 = vshrl.u32 %v2512, 7
    %v2514 = vsub.s32 %v2511, %v2513
    %v2515 = vrot.slane %v2501, %v2514
    %v2516 = vcombine.low %v2059, %v2205
    %v2517 = vcombine.high %v2059, %v2205
    %v2519 = vunpack.c.l.s4 1983009808
    %v2520 = vunpack.c.0.s8 %v2519
    %v2521 = vlaneseq
    %v2522 = vshrl.u32 %v2521, 7
    %v2523 = vsub.s32 %v2520, %v2522
    %v2524 = vrot.slane %v2516, %v2523
    %v2526 = vunpack.c.l.s4 1983009808
    %v2527 = vunpack.c.0.s8 %v2526
    %v2528 = vlaneseq
    %v2529 = vshrl.u32 %v2528, 7
    %v2530 = vsub.s32 %v2527, %v2529
    %v2531 = vrot.slane %v2517, %v2530
    %v2532 = vcombine.low %v2508, %v2524
    %v2533 = vcombine.high %v2508, %v2524
    %v2535 = vunpack.c.l.s4 1934713408
    %v2536 = vunpack.c.0.s8 %v2535
    %v2537 = vlaneseq
    %v2538 = vshrl.u32 %v2537, 7
    %v2539 = vsub.s32 %v2536, %v2538
    %v2540 = vrot.slane %v2532, %v2539
    %v2542 = vunpack.c.l.s4 1934713408
    %v2543 = vunpack.c.0.s8 %v2542
    %v2544 = vlaneseq
    %v2545 = vshrl.u32 %v2544, 7
    %v2546 = vsub.s32 %v2543, %v2545
    %v2547 = vrot.slane %v2533, %v2546
    %v2548 = vcombine.low %v2515, %v2531
    %v2549 = vcombine.high %v2515, %v2531
    %v2551 = vunpack.c.l.s4 1934713408
    %v2552 = vunpack.c.0.s8 %v2551
    %v2553 = vlaneseq
    %v2554 = vshrl.u32 %v2553, 7
    %v2555 = vsub.s32 %v2552, %v2554
    %v2556 = vrot.slane %v2548, %v2555
    %v2558 = vunpack.c.l.s4 1934713408
    %v2559 = vunpack.c.0.s8 %v2558
    %v2560 = vlaneseq
    %v2561 = vshrl.u32 %v2560, 7
    %v2562 = vsub.s32 %v2559, %v2561
    %v2563 = vrot.slane %v2549, %v2562
    %v2564 = vcombine.high %v2540, 0.0
    %v2565 = vcombine.high %v2547, 0.0
    %v2566 = vcombine.high %v2556, 0.0
    %v2567 = vcombine.high %v2563, 0.0
    %v2568 = vcombine.low %v2278, %v2424
    %v2569 = vcombine.high %v2278, %v2424
    %v2571 = vunpack.c.l.s4 1983009808
    %v2572 = vunpack.c.0.s8 %v2571
    %v2573 = vlaneseq
    %v2574 = vshrl.u32 %v2573, 7
    %v2575 = vsub.s32 %v2572, %v2574
    %v2576 = vrot.slane %v2568, %v2575
    %v2578 = vunpack.c.l.s4 1983009808
    %v2579 = vunpack.c.0.s8 %v2578
    %v2580 = vlaneseq
    %v2581 = vshrl.u32 %v2580, 7
    %v2582 = vsub.s32 %v2579, %v2581
    %v2583 = vrot.slane %v2569, %v2582
    %v2584 = vcombine.low %v2351, %v2497
    %v2585 = vcombine.high %v2351, %v2497
    %v2587 = vunpack.c.l.s4 1983009808
    %v2588 = vunpack.c.0.s8 %v2587
    %v2589 = vlaneseq
    %v2590 = vshrl.u32 %v2589, 7
    %v2591 = vsub.s32 %v2588, %v2590
    %v2592 = vrot.slane %v2584, %v2591
    %v2594 = vunpack.c.l.s4 1983009808
    %v2595 = vunpack.c.0.s8 %v2594
    %v2596 = vlaneseq
    %v2597 = vshrl.u32 %v2596, 7
    %v2598 = vsub.s32 %v2595, %v2597
    %v2599 = vrot.slane %v2585, %v2598
    %v2600 = vcombine.low %v2576, %v2592
    %v2601 = vcombine.high %v2576, %v2592
    %v2603 = vunpack.c.l.s4 1934713408
    %v2604 = vunpack.c.0.s8 %v2603
    %v2605 = vlaneseq
    %v2606 = vshrl.u32 %v2605, 7
    %v2607 = vsub.s32 %v2604, %v2606
    %v2608 = vrot.slane %v2600, %v2607
    %v2610 = vunpack.c.l.s4 1934713408
    %v2611 = vunpack.c.0.s8 %v2610
    %v2612 = vlaneseq
    %v2613 = vshrl.u32 %v2612, 7
    %v2614 = vsub.s32 %v2611, %v2613
    %v2615 = vrot.slane %v2601, %v2614
    %v2616 = vcombine.low %v2583, %v2599
    %v2617 = vcombine.high %v2583, %v2599
    %v2619 = vunpack.c.l.s4 1934713408
    %v2620 = vunpack.c.0.s8 %v2619
    %v2621 = vlaneseq
    %v2622 = vshrl.u32 %v2621, 7
    %v2623 = vsub.s32 %v2620, %v2622
    %v2624 = vrot.slane %v2616, %v2623
    %v2626 = vunpack.c.l.s4 1934713408
    %v2627 = vunpack.c.0.s8 %v2626
    %v2628 = vlaneseq
    %v2629 = vshrl.u32 %v2628, 7
    %v2630 = vsub.s32 %v2627, %v2629
    %v2631 = vrot.slane %v2617, %v2630
    %v2632 = vcombine.high %v2608, 0.0
    %v2633 = vcombine.high %v2615, 0.0
    %v2634 = vcombine.high %v2624, 0.0
    %v2635 = vcombine.high %v2631, 0.0
    %v2636 = vcombine.low %v2540, %v2547
    %v2638 = vunpack.c.l.s4 1983009808
    %v2639 = vunpack.c.0.s8 %v2638
    %v2640 = vlaneseq
    %v2641 = vshrl.u32 %v2640, 7
    %v2642 = vsub.s32 %v2639, %v2641
    %v2643 = vrot.slane %v2636, %v2642
    %v2644 = vcombine.low %v2564, %v2565
    %v2646 = vunpack.c.l.s4 1983009808
    %v2647 = vunpack.c.0.s8 %v2646
    %v2648 = vlaneseq
    %v2649 = vshrl.u32 %v2648, 7
    %v2650 = vsub.s32 %v2647, %v2649
    %v2651 = vrot.slane %v2644, %v2650
    %v2652 = vcombine.low %v2556, %v2563
    %v2654 = vunpack.c.l.s4 1983009808
    %v2655 = vunpack.c.0.s8 %v2654
    %v2656 = vlaneseq
    %v2657 = vshrl.u32 %v2656, 7
    %v2658 = vsub.s32 %v2655, %v2657
    %v2659 = vrot.slane %v2652, %v2658
    %v2660 = vcombine.low %v2566, %v2567
    %v2662 = vunpack.c.l.s4 1983009808
    %v2663 = vunpack.c.0.s8 %v2662
    %v2664 = vlaneseq
    %v2665 = vshrl.u32 %v2664, 7
    %v2666 = vsub.s32 %v2663, %v2665
    %v2667 = vrot.slane %v2660, %v2666
    %v2668 = vcombine.low %v2643, %v2651
    %v2669 = vcombine.high %v2643, %v2651
    %v2671 = vunpack.c.l.s4 1934713408
    %v2672 = vunpack.c.0.s8 %v2671
    %v2673 = vlaneseq
    %v2674 = vshrl.u32 %v2673, 7
    %v2675 = vsub.s32 %v2672, %v2674
    %v2676 = vrot.slane %v2668, %v2675
    %v2678 = vunpack.c.l.s4 1934713408
    %v2679 = vunpack.c.0.s8 %v2678
    %v2680 = vlaneseq
    %v2681 = vshrl.u32 %v2680, 7
    %v2682 = vsub.s32 %v2679, %v2681
    %v2683 = vrot.slane %v2669, %v2682
    %v2684 = vcombine.low %v2659, %v2667
    %v2685 = vcombine.high %v2659, %v2667
    %v2687 = vunpack.c.l.s4 1934713408
    %v2688 = vunpack.c.0.s8 %v2687
    %v2689 = vlaneseq
    %v2690 = vshrl.u32 %v2689, 7
    %v2691 = vsub.s32 %v2688, %v2690
    %v2692 = vrot.slane %v2684, %v2691
    %v2694 = vunpack.c.l.s4 1934713408
    %v2695 = vunpack.c.0.s8 %v2694
    %v2696 = vlaneseq
    %v2697 = vshrl.u32 %v2696, 7
    %v2698 = vsub.s32 %v2695, %v2697
    %v2699 = vrot.slane %v2685, %v2698
    %v2700 = vcombine.low %v2676, %v2692
    %v2701 = vcombine.high %v2676, %v2692
    %v2702 = vcombine.low %v2683, %v2699
    %v2703 = vcombine.high %v2683, %v2699
    %v2704 = vcombine.low %v2608, %v2615
    %v2706 = vunpack.c.l.s4 1983009808
    %v2707 = vunpack.c.0.s8 %v2706
    %v2708 = vlaneseq
    %v2709 = vshrl.u32 %v2708, 7
    %v2710 = vsub.s32 %v2707, %v2709
    %v2711 = vrot.slane %v2704, %v2710
    %v2712 = vcombine.low %v2632, %v2633
    %v2714 = vunpack.c.l.s4 1983009808
    %v2715 = vunpack.c.0.s8 %v2714
    %v2716 = vlaneseq
    %v2717 = vshrl.u32 %v2716, 7
    %v2718 = vsub.s32 %v2715, %v2717
    %v2719 = vrot.slane %v2712, %v2718
    %v2720 = vcombine.low %v2624, %v2631
    %v2722 = vunpack.c.l.s4 1983009808
    %v2723 = vunpack.c.0.s8 %v2722
    %v2724 = vlaneseq
    %v2725 = vshrl.u32 %v2724, 7
    %v2726 = vsub.s32 %v2723, %v2725
    %v2727 = vrot.slane %v2720, %v2726
    %v2728 = vcombine.low %v2634, %v2635
    %v2730 = vunpack.c.l.s4 1983009808
    %v2731 = vunpack.c.0.s8 %v2730
    %v2732 = vlaneseq
    %v2733 = vshrl.u32 %v2732, 7
    %v2734 = vsub.s32 %v2731, %v2733
    %v2735 = vrot.slane %v2728, %v2734
    %v2736 = vcombine.low %v2711, %v2719
    %v2737 = vcombine.high %v2711, %v2719
    %v2739 = vunpack.c.l.s4 1934713408
    %v2740 = vunpack.c.0.s8 %v2739
    %v2741 = vlaneseq
    %v2742 = vshrl.u32 %v2741, 7
    %v2743 = vsub.s32 %v2740, %v2742
    %v2744 = vrot.slane %v2736, %v2743
    %v2746 = vunpack.c.l.s4 1934713408
    %v2747 = vunpack.c.0.s8 %v2746
    %v2748 = vlaneseq
    %v2749 = vshrl.u32 %v2748, 7
    %v2750 = vsub.s32 %v2747, %v2749
    %v2751 = vrot.slane %v2737, %v2750
    %v2752 = vcombine.low %v2727, %v2735
    %v2753 = vcombine.high %v2727, %v2735
    %v2755 = vunpack.c.l.s4 1934713408
    %v2756 = vunpack.c.0.s8 %v2755
    %v2757 = vlaneseq
    %v2758 = vshrl.u32 %v2757, 7
    %v2759 = vsub.s32 %v2756, %v2758
    %v2760 = vrot.slane %v2752, %v2759
    %v2762 = vunpack.c.l.s4 1934713408
    %v2763 = vunpack.c.0.s8 %v2762
    %v2764 = vlaneseq
    %v2765 = vshrl.u32 %v2764, 7
    %v2766 = vsub.s32 %v2763, %v2765
    %v2767 = vrot.slane %v2753, %v2766
    %v2768 = vcombine.low %v2744, %v2760
    %v2769 = vcombine.high %v2744, %v2760
    %v2770 = vcombine.low %v2751, %v2767
    %v2771 = vcombine.high %v2751, %v2767
    %2774 = vrot.lane.b32.xlu0 %v2701, 8
    %v2775 = vpop.permute.xlu0 %2774
    %2776 = vrot.lane.b32.xlu0 %v2769, 8
    %v2777 = vpop.permute.xlu0 %2776
    %2782 = vrot.lane.b32.xlu0 %v2702, 16
    %v2783 = vpop.permute.xlu0 %2782
    %2784 = vrot.lane.b32.xlu0 %v2770, 16
    %v2785 = vpop.permute.xlu0 %2784
    %2790 = vrot.lane.b32.xlu0 %v2703, 24
    %v2791 = vpop.permute.xlu0 %2790
    %2792 = vrot.lane.b32.xlu0 %v2771, 24
    %v2793 = vpop.permute.xlu0 %2792
    %v2796 = vsel %vm1204, %v2700, %v2775
    %v2797 = vsel %vm1204, %v2768, %v2777
    %vm2798 = vcmask 130048
    %v2799 = vsel %vm2798, %v2796, %v2783
    %v2800 = vsel %vm2798, %v2797, %v2785
    %vm2801 = vcmask 195584
    %v2802 = vsel %vm2801, %v2799, %v2791
    %v2803 = vsel %vm2801, %v2800, %v2793
    %s2804 = scalar_lea.vmem %s1, 96
    %v2805 = vld [vmem:[%s2804] sm:$0xff]
    %v2806 = vld [vmem:[%s2804 + $0x8] sm:$0xff]
    %v2807 = vld [vmem:[%s2804 + $0x10] sm:$0xff]
    %v2808 = vld [vmem:[%s2804 + $0x18] sm:$0xff]
    %v2810 = vsel %vm40, %v2802, 0
    %v2813 = vsel %vm40, %v2803, 0
    %2815 = vmatprep.subr.mxu0 0.0
    %2816 = vmatpush1.msra.mxu0 %v2805
    %2817 = vmatprep.subr.mxu0 0.0
    %2818 = vmatpush1.msra.mxu0 %v2806
    %2819 = vmatprep.subr.mxu0 0.0
    %2820 = vmatpush1.msra.mxu0 %v2807
    %2821 = vmatprep.subr.mxu0 0.0
    %2822 = vmatpush1.msra.mxu0 %v2808
    %2823 = vmatprep.subr.mxu0 0.0
    %2824 = vmatpush1.msra.mxu0 0.0
    %2825 = vmatprep.subr.mxu0 0.0
    %2826 = vmatpush1.msra.mxu0 0.0
    %2827 = vmatprep.subr.mxu0 0.0
    %2828 = vmatpush1.msra.mxu0 0.0
    %2829 = vmatprep.subr.mxu0 0.0
    %2830 = vmatpush1.msra.mxu0 0.0
    %2831 = vmatprep.subr.mxu0 0.0
    %2832 = vmatpush1.msra.mxu0 0.0
    %2833 = vmatprep.subr.mxu0 0.0
    %2834 = vmatpush1.msra.mxu0 0.0
    %2835 = vmatprep.subr.mxu0 0.0
    %2836 = vmatpush1.msra.mxu0 0.0
    %2837 = vmatprep.subr.mxu0 0.0
    %2838 = vmatpush1.msra.mxu0 0.0
    %2839 = vmatprep.subr.mxu0 0.0
    %2840 = vmatpush1.msra.mxu0 0.0
    %2841 = vmatprep.subr.mxu0 0.0
    %2842 = vmatpush1.msra.mxu0 0.0
    %2843 = vmatprep.subr.mxu0 0.0
    %2844 = vmatpush1.msra.mxu0 0.0
    %2845 = vmatprep.subr.mxu0 0.0
    %2846 = vmatpush1.msra.mxu0 0.0
    %2847 = vmatprep.subr.mxu0 0.0
    %2848 = vmatpush1.msra.mxu0 0.0
    %2849 = vmatprep.subr.mxu0 0.0
    %2850 = vmatpush1.msra.mxu0 0.0
    %2851 = vmatprep.subr.mxu0 0.0
    %2852 = vmatpush1.msra.mxu0 0.0
    %2853 = vmatprep.subr.mxu0 0.0
    %2854 = vmatpush1.msra.mxu0 0.0
    %2855 = vmatprep.subr.mxu0 0.0
    %2856 = vmatpush1.msra.mxu0 0.0
    %2857 = vmatprep.subr.mxu0 0.0
    %2858 = vmatpush1.msra.mxu0 0.0
    %2859 = vmatprep.subr.mxu0 0.0
    %2860 = vmatpush1.msra.mxu0 0.0
    %2861 = vmatprep.subr.mxu0 0.0
    %2862 = vmatpush1.msra.mxu0 0.0
    %2863 = vmatprep.subr.mxu0 0.0
    %2864 = vmatpush1.msra.mxu0 0.0
    %2865 = vmatprep.subr.mxu0 0.0
    %2866 = vmatpush1.msra.mxu0 0.0
    %2867 = vmatprep.subr.mxu0 0.0
    %2868 = vmatpush1.msra.mxu0 0.0
    %2869 = vmatprep.subr.mxu0 0.0
    %2870 = vmatpush1.msra.mxu0 0.0
    %2871 = vmatprep.subr.mxu0 0.0
    %2872 = vmatpush1.msra.mxu0 0.0
    %2873 = vmatprep.subr.mxu0 0.0
    %2874 = vmatpush1.msra.mxu0 0.0
    %2875 = vmatprep.subr.mxu0 0.0
    %2876 = vmatpush1.msra.mxu0 0.0
    %2877 = vmatprep.subr.mxu0 0.0
    %2878 = vmatpush1.msra.mxu0 0.0
    %2879 = vmatprep.mubr.f32.mxu0 0.0
    %2880 = vmatmul.mubr.f32.gmra.mrb[0].mxu0 %v2810
    %v2881 = vpop.f32.mrb[0].mxu0
    %v2882 = vadd.f32 0.0, %v2881
    %v2883 = vpop.f32.mrb[0].mxu0
    %2884 = vmatprep.mubr.f32.mxu0 0.0
    %2885 = vmatmul.mubr.f32.gmra.mrb[0].mxu0 %v2813
    %v2886 = vpop.f32.mrb[0].mxu0
    %v2887 = vadd.f32 0.0, %v2886
    %v2888 = vpop.f32.mrb[0].mxu0
    %2889 = vdwg.mxu0
    %v2890 = vadd.f32 %v38, %v2882
    %v2891 = vadd.f32 %v39, %v2887
    %v2892 = vld [vmem:[%s4 + $0x3] sm:$0x1]
    %v2893 = vlaneseq
    %v2894 = vshrl.u32 %v2893, 7
    %v2895 = vsub.s32 0, %v2894
    %v2896 = vrot.slane %v2892, %v2895
    %v2897 = vadd.f32 %v2890, %v2896
    %v2898 = vadd.f32 %v2891, %v2896
    %v2899 = vsel %vm40, %v2897, 0.0
    %2900 = vadd.xlane.f32.xlu0 %v2899
    %v2901 = vpop.xlane.xlu0 %2900
    %v2902 = vsel %vm40, %v2898, 0.0
    %2903 = vadd.xlane.f32.xlu0 %v2902
    %v2904 = vpop.xlane.xlu0 %2903
    %v2905 = vmul.f32 %v2901, %v47
    %v2906 = vmul.f32 %v2904, %v47
    %v2907 = vsub.f32 %v2897, %v2905
    %v2908 = vsub.f32 %v2898, %v2906
    %v2909 = vmul.f32 %v2907, %v2907
    %v2910 = vmul.f32 %v2908, %v2908
    %v2911 = vsel %vm40, %v2909, 0.0
    %2912 = vadd.xlane.f32.xlu0 %v2911
    %v2913 = vpop.xlane.xlu0 %2912
    %v2914 = vsel %vm40, %v2910, 0.0
    %2915 = vadd.xlane.f32.xlu0 %v2914
    %v2916 = vpop.xlane.xlu0 %2915
    %v2917 = vmul.f32 %v2913, %v47
    %v2918 = vmul.f32 %v2916, %v47
    %v2919 = vadd.f32 %v2917, 1e-05
    %v2920 = vadd.f32 %v2918, 1e-05
    %v2921 = vrsqrt.pop %v2919
    %v2922 = vrsqrt.pop %v2920
    %v2923 = vmul.f32 %v2907, %v2921
    %v2924 = vmul.f32 %v2908, %v2922
    %v2925 = vld [vmem:[%s2] sm:$0xff]
    %v2926 = vld [vmem:[%s2 + $0x8] sm:$0xff]
    %v2927 = vld [vmem:[%s2 + $0x10] sm:$0xff]
    %v2928 = vld [vmem:[%s2 + $0x18] sm:$0xff]
    %v2929 = vld [vmem:[%s5] sm:$0x1]
    %v2931 = vlaneseq
    %v2932 = vshrl.u32 %v2931, 7
    %v2933 = vsub.s32 0, %v2932
    %v2934 = vrot.slane %v2929, %v2933
    %v2937 = vsel %vm40, %v2923, 0
    %v2940 = vsel %vm40, %v2924, 0
    %2942 = vmatprep.subr.mxu0 0.0
    %2943 = vmatpush1.msra.mxu0 %v2925
    %2944 = vmatprep.subr.mxu0 0.0
    %2945 = vmatpush1.msra.mxu0 %v2926
    %2946 = vmatprep.subr.mxu0 0.0
    %2947 = vmatpush1.msra.mxu0 %v2927
    %2948 = vmatprep.subr.mxu0 0.0
    %2949 = vmatpush1.msra.mxu0 %v2928
    %2950 = vmatprep.subr.mxu0 0.0
    %2951 = vmatpush1.msra.mxu0 0.0
    %2952 = vmatprep.subr.mxu0 0.0
    %2953 = vmatpush1.msra.mxu0 0.0
    %2954 = vmatprep.subr.mxu0 0.0
    %2955 = vmatpush1.msra.mxu0 0.0
    %2956 = vmatprep.subr.mxu0 0.0
    %2957 = vmatpush1.msra.mxu0 0.0
    %2958 = vmatprep.subr.mxu0 0.0
    %2959 = vmatpush1.msra.mxu0 0.0
    %2960 = vmatprep.subr.mxu0 0.0
    %2961 = vmatpush1.msra.mxu0 0.0
    %2962 = vmatprep.subr.mxu0 0.0
    %2963 = vmatpush1.msra.mxu0 0.0
    %2964 = vmatprep.subr.mxu0 0.0
    %2965 = vmatpush1.msra.mxu0 0.0
    %2966 = vmatprep.subr.mxu0 0.0
    %2967 = vmatpush1.msra.mxu0 0.0
    %2968 = vmatprep.subr.mxu0 0.0
    %2969 = vmatpush1.msra.mxu0 0.0
    %2970 = vmatprep.subr.mxu0 0.0
    %2971 = vmatpush1.msra.mxu0 0.0
    %2972 = vmatprep.subr.mxu0 0.0
    %2973 = vmatpush1.msra.mxu0 0.0
    %2974 = vmatprep.subr.mxu0 0.0
    %2975 = vmatpush1.msra.mxu0 0.0
    %2976 = vmatprep.subr.mxu0 0.0
    %2977 = vmatpush1.msra.mxu0 0.0
    %2978 = vmatprep.subr.mxu0 0.0
    %2979 = vmatpush1.msra.mxu0 0.0
    %2980 = vmatprep.subr.mxu0 0.0
    %2981 = vmatpush1.msra.mxu0 0.0
    %2982 = vmatprep.subr.mxu0 0.0
    %2983 = vmatpush1.msra.mxu0 0.0
    %2984 = vmatprep.subr.mxu0 0.0
    %2985 = vmatpush1.msra.mxu0 0.0
    %2986 = vmatprep.subr.mxu0 0.0
    %2987 = vmatpush1.msra.mxu0 0.0
    %2988 = vmatprep.subr.mxu0 0.0
    %2989 = vmatpush1.msra.mxu0 0.0
    %2990 = vmatprep.subr.mxu0 0.0
    %2991 = vmatpush1.msra.mxu0 0.0
    %2992 = vmatprep.subr.mxu0 0.0
    %2993 = vmatpush1.msra.mxu0 0.0
    %2994 = vmatprep.subr.mxu0 0.0
    %2995 = vmatpush1.msra.mxu0 0.0
    %2996 = vmatprep.subr.mxu0 0.0
    %2997 = vmatpush1.msra.mxu0 0.0
    %2998 = vmatprep.subr.mxu0 0.0
    %2999 = vmatpush1.msra.mxu0 0.0
    %3000 = vmatprep.subr.mxu0 0.0
    %3001 = vmatpush1.msra.mxu0 0.0
    %3002 = vmatprep.subr.mxu0 0.0
    %3003 = vmatpush1.msra.mxu0 0.0
    %3004 = vmatprep.subr.mxu0 0.0
    %3005 = vmatpush1.msra.mxu0 0.0
    %3006 = vmatprep.mubr.f32.mxu0 0.0
    %3007 = vmatmul.mubr.f32.gmra.mrb[0].mxu0 %v2937
    %v3008 = vpop.f32.mrb[0].mxu0
    %v3009 = vadd.f32 %v2934, %v3008
    %v3010 = vpop.f32.mrb[0].mxu0
    %3011 = vmatprep.mubr.f32.mxu0 0.0
    %3012 = vmatmul.mubr.f32.gmra.mrb[0].mxu0 %v2940
    %v3013 = vpop.f32.mrb[0].mxu0
    %v3014 = vadd.f32 %v2934, %v3013
    %v3015 = vpop.f32.mrb[0].mxu0
    %3016 = vdwg.mxu0
    %v3017 = vmul.f32 %v3009, 0.5
    %v3018 = vmul.f32 %v3014, 0.5
    %v3019 = vmul.f32 %v3009, 0.044715
    %v3020 = vmul.f32 %v3014, 0.044715
    %v3021 = vmul.f32 %v3019, %v3009
    %v3022 = vmul.f32 %v3020, %v3014
    %v3023 = vmul.f32 %v3021, %v3009
    %v3024 = vmul.f32 %v3022, %v3014
    %v3025 = vadd.f32 %v3009, %v3023
    %v3026 = vadd.f32 %v3014, %v3024
    %v3027 = vmul.f32 %v3025, 0.7978846
    %v3028 = vmul.f32 %v3026, 0.7978846
    %v3029 = vtanh.pop %v3027
    %v3030 = vtanh.pop %v3028
    %v3031 = vadd.f32 %v3029, 1.0
    %v3032 = vadd.f32 %v3030, 1.0
    %v3033 = vmul.f32 %v3017, %v3031
    %v3034 = vmul.f32 %v3018, %v3032
    %v3035 = vld [vmem:[%s3] sm:$0xff]
    %v3036 = vld [vmem:[%s3 + $0x8] sm:$0xff]
    %v3037 = vld [vmem:[%s3 + $0x10] sm:$0xff]
    %v3038 = vld [vmem:[%s3 + $0x18] sm:$0xff]
    %v3039 = vld [vmem:[%s3 + $0x20] sm:$0xff]
    %v3040 = vld [vmem:[%s3 + $0x28] sm:$0xff]
    %v3041 = vld [vmem:[%s3 + $0x30] sm:$0xff]
    %v3042 = vld [vmem:[%s3 + $0x38] sm:$0xff]
    %v3043 = vld [vmem:[%s3 + $0x40] sm:$0xff]
    %v3044 = vld [vmem:[%s3 + $0x48] sm:$0xff]
    %v3045 = vld [vmem:[%s3 + $0x50] sm:$0xff]
    %v3046 = vld [vmem:[%s3 + $0x58] sm:$0xff]
    %v3047 = vld [vmem:[%s3 + $0x60] sm:$0xff]
    %v3048 = vld [vmem:[%s3 + $0x68] sm:$0xff]
    %v3049 = vld [vmem:[%s3 + $0x70] sm:$0xff]
    %v3050 = vld [vmem:[%s3 + $0x78] sm:$0xff]
    %3051 = vmatprep.subr.mxu0 0.0
    %3052 = vmatpush1.msra.mxu0 %v3035
    %3053 = vmatprep.subr.mxu0 0.0
    %3054 = vmatpush1.msra.mxu0 %v3036
    %3055 = vmatprep.subr.mxu0 0.0
    %3056 = vmatpush1.msra.mxu0 %v3037
    %3057 = vmatprep.subr.mxu0 0.0
    %3058 = vmatpush1.msra.mxu0 %v3038
    %3059 = vmatprep.subr.mxu0 0.0
    %3060 = vmatpush1.msra.mxu0 %v3039
    %3061 = vmatprep.subr.mxu0 0.0
    %3062 = vmatpush1.msra.mxu0 %v3040
    %3063 = vmatprep.subr.mxu0 0.0
    %3064 = vmatpush1.msra.mxu0 %v3041
    %3065 = vmatprep.subr.mxu0 0.0
    %3066 = vmatpush1.msra.mxu0 %v3042
    %3067 = vmatprep.subr.mxu0 0.0
    %3068 = vmatpush1.msra.mxu0 %v3043
    %3069 = vmatprep.subr.mxu0 0.0
    %3070 = vmatpush1.msra.mxu0 %v3044
    %3071 = vmatprep.subr.mxu0 0.0
    %3072 = vmatpush1.msra.mxu0 %v3045
    %3073 = vmatprep.subr.mxu0 0.0
    %3074 = vmatpush1.msra.mxu0 %v3046
    %3075 = vmatprep.subr.mxu0 0.0
    %3076 = vmatpush1.msra.mxu0 %v3047
    %3077 = vmatprep.subr.mxu0 0.0
    %3078 = vmatpush1.msra.mxu0 %v3048
    %3079 = vmatprep.subr.mxu0 0.0
    %3080 = vmatpush1.msra.mxu0 %v3049
    %3081 = vmatprep.subr.mxu0 0.0
    %3082 = vmatpush1.msra.mxu0 %v3050
    %3083 = vmatprep.subr.mxu0 0.0
    %3084 = vmatpush1.msra.mxu0 0.0
    %3085 = vmatprep.subr.mxu0 0.0
    %3086 = vmatpush1.msra.mxu0 0.0
    %3087 = vmatprep.subr.mxu0 0.0
    %3088 = vmatpush1.msra.mxu0 0.0
    %3089 = vmatprep.subr.mxu0 0.0
    %3090 = vmatpush1.msra.mxu0 0.0
    %3091 = vmatprep.subr.mxu0 0.0
    %3092 = vmatpush1.msra.mxu0 0.0
    %3093 = vmatprep.subr.mxu0 0.0
    %3094 = vmatpush1.msra.mxu0 0.0
    %3095 = vmatprep.subr.mxu0 0.0
    %3096 = vmatpush1.msra.mxu0 0.0
    %3097 = vmatprep.subr.mxu0 0.0
    %3098 = vmatpush1.msra.mxu0 0.0
    %3099 = vmatprep.subr.mxu0 0.0
    %3100 = vmatpush1.msra.mxu0 0.0
    %3101 = vmatprep.subr.mxu0 0.0
    %3102 = vmatpush1.msra.mxu0 0.0
    %3103 = vmatprep.subr.mxu0 0.0
    %3104 = vmatpush1.msra.mxu0 0.0
    %3105 = vmatprep.subr.mxu0 0.0
    %3106 = vmatpush1.msra.mxu0 0.0
    %3107 = vmatprep.subr.mxu0 0.0
    %3108 = vmatpush1.msra.mxu0 0.0
    %3109 = vmatprep.subr.mxu0 0.0
    %3110 = vmatpush1.msra.mxu0 0.0
    %3111 = vmatprep.subr.mxu0 0.0
    %3112 = vmatpush1.msra.mxu0 0.0
    %3113 = vmatprep.subr.mxu0 0.0
    %3114 = vmatpush1.msra.mxu0 0.0
    %3115 = vmatprep.mubr.f32.mxu0 0.0
    %3116 = vmatmul.mubr.f32.gmra.mrb[0].mxu0 %v3033
    %v3117 = vpop.f32.mrb[0].mxu0
    %v3118 = vadd.f32 0.0, %v3117
    %v3119 = vpop.f32.mrb[0].mxu0
    %3120 = vmatprep.mubr.f32.mxu0 0.0
    %3121 = vmatmul.mubr.f32.gmra.mrb[0].mxu0 %v3034
    %v3122 = vpop.f32.mrb[0].mxu0
    %v3123 = vadd.f32 0.0, %v3122
    %v3124 = vpop.f32.mrb[0].mxu0
    %3125 = vdwg.mxu0
    %v3126 = vadd.f32 %v2897, %v3118
    %v3127 = vadd.f32 %v2898, %v3123
    %v3128 = vld [vmem:[%s4 + $0x4] sm:$0x1]
    %v3129 = vlaneseq
    %v3130 = vshrl.u32 %v3129, 7
    %v3131 = vsub.s32 0, %v3130
    %v3132 = vrot.slane %v3128, %v3131
    %v3133 = vadd.f32 %v3126, %v3132
    %v3134 = vadd.f32 %v3127, %v3132
    %3135 = vst.msk [vmem:[#allocation5] sm:$0xff] %vm40, %v3133
    %3136 = vst.msk [vmem:[#allocation5 + $0x8] sm:$0xff] %vm40, %v3134
    // Predicated region
    $region30: #{tpu_custom_call.1} parent=1 // pred_check
      _
    $region31: #{tpu_custom_call.1} parent=1 // pred_check_branch
      %3138 = sbr.rel (0) target = $region33
    $region32: #{tpu_custom_call.1} parent=1 // pred_region
      %s3140 = ssub.s32 256, 256
      %3141 = vsyncadd [#allocation4], %s3140
      %s3142 = sshll.u32 [#allocation5], 4
      %s3143 = int_to_ptr.vmem [resolvable:$true] %s3142
      %3148 = dma.vmem_to_hbm [thread:$0]  %s3143, 256, %s6, [#allocation4], 128, 128, 8
    $region33: #{tpu_custom_call.1} parent=1 // pred_fallthru
      _
    // Predicated region
    $region34: #{tpu_custom_call.1} parent=1 // pred_check
      _
    $region35: #{tpu_custom_call.1} parent=1 // pred_check_branch
      %3150 = sbr.rel (0) target = $region37
    $region36: #{tpu_custom_call.1} parent=1 // pred_region
      %3151 = dma.done [#allocation4], 256
    $region37: #{tpu_custom_call.1} parent=1 // pred_fallthru
      _
    %3152 = vsyncpa [#allocation3], 1
    %3153 = vsyncpa [#allocation4], 1

</llo_original>
